<compile_context>
chip_gen: v7x
topology: tpu7x:2x2x1
jax: 0.10.0
libtpu: 0.0.40
codegen_flags: <defaults>
</compile_context>

<pallas_src>
import math

import jax
import jax.numpy as jnp
from jax.experimental import pallas as pl
from jax.experimental.pallas import tpu as pltpu

KSIZE = 7
PAD = KSIZE // 2
KK = KSIZE * KSIZE


def _round_up(a, b):
    return ((a + b - 1) // b) * b


def _largest_divisor_at_most(n, cap):
    cap = max(1, min(int(cap), n))
    for d in range(cap, 0, -1):
        if n % d == 0:
            return d
    return 1


def _vmem_capacity_bytes():
    try:
        info = pltpu.get_tpu_info()
        cap = getattr(info, "vmem_capacity_bytes", None)
        if cap:
            return int(cap)
    except Exception:
        pass
    return 64 * 1024 * 1024  # conservative fallback: v7x physical per-TC VMEM


def _make_kernel(C, TC, BN, H, W, cc_chunk):
    HW = H * W
    inv_c = 1.0 / float(C)
    n_slabs = TC // cc_chunk

    def kernel(x_ref, w_ref, o_ref, sum_ref, max_ref):
        ci = pl.program_id(1)

        @pl.when(ci == 0)
        def _():
            sum_ref[...] = jnp.zeros_like(sum_ref)
            max_ref[...] = jnp.full_like(max_ref, -jnp.inf)

        # Partial channel sum / max of this (BN, TC, HW) block.  Slabs of
        # cc_chunk channels keep live vregs bounded; the sublane-axis reduce
        # goes to the XLU, leaving the VALU mostly idle (HBM-bound stream).
        # (MXU offload of the sum via ones(1,cc) @ slab is a possible sweep
        #  for bf16 inputs; roughly neutral for f32, so not done here.)
        def slab(c0):
            xs = x_ref[:, pl.ds(c0, cc_chunk), :].astype(jnp.float32)
            return jnp.sum(xs, axis=1), jnp.max(xs, axis=1)

        if n_slabs <= 8:
            psum, pmax = slab(0)
            for i in range(1, n_slabs):
                s, m = slab(i * cc_chunk)
                psum = psum + s
                pmax = jnp.maximum(pmax, m)
        else:
            def body(i, carry):
                ps, pm = carry
                c0 = pl.multiple_of(i * cc_chunk, cc_chunk)
                s, m = slab(c0)
                return ps + s, jnp.maximum(pm, m)

            psum, pmax = jax.lax.fori_loop(
                0, n_slabs, body,
                (jnp.zeros((BN, HW), jnp.float32),
                 jnp.full((BN, HW), -jnp.inf, jnp.float32)))

        sum_ref[...] = sum_ref[...] + psum
        max_ref[...] = jnp.maximum(max_ref[...], pmax)

        # Last channel step: 7x7 conv over (avg, max) planes + sigmoid, done
        # entirely in the flattened lane-dense layout.
        @pl.when(ci == pl.num_programs(1) - 1)
        def _():
            avg = sum_ref[...] * inv_c       # (BN, HW) f32
            mx = max_ref[...]                # (BN, HW) f32

            def lane_roll(p, s):
                # result[..., i] = p[..., (i + s) mod HW]
                shift = (-s) % HW
                if shift == 0:
                    return p
                return pltpu.roll(p, shift, axis=1)

            pos = jax.lax.broadcasted_iota(jnp.int32, (1, HW), 1)
            if (W & (W - 1)) == 0:           # power-of-two W: pure bit ops
                col = pos & (W - 1)
                row = pos >> (W.bit_length() - 1)
            else:
                col = pos % W
                row = pos // W

            # Hoisted column-shifted planes (XLU rolls) with border masks.
            shifted_a, shifted_m = [], []
            for dw in range(-PAD, PAD + 1):
                wmask = ((col + dw >= 0) & (col + dw < W)).astype(jnp.float32)
                shifted_a.append(lane_roll(avg, dw) * wmask)
                shifted_m.append(lane_roll(mx, dw) * wmask)

            acc = jnp.zeros((BN, HW), jnp.float32)
            for dh in range(-PAD, PAD + 1):
                kh = dh + PAD
                row_acc = jnp.zeros((BN, HW), jnp.float32)
                for dw in range(-PAD, PAD + 1):
                    kw = dw + PAD
                    w_a = w_ref[0 * KK + kh * KSIZE + kw]
                    w_m = w_ref[1 * KK + kh * KSIZE + kw]
                    row_acc = row_acc + w_a * shifted_a[kw] + w_m * shifted_m[kw]
                hmask = ((row + dh >= 0) & (row + dh < H)).astype(jnp.float32)
                acc = acc + lane_roll(row_acc, dh * W) * hmask

            o_ref[...] = jax.nn.sigmoid(acc)[:, None, :].astype(o_ref.dtype)

    return kernel


def spatial_attention(x, weight, *, c_tile=None, vmem_limit_bytes=None):
    """x: (N, C, H, W); weight: (1, 2, 7, 7), no bias -> (N, 1, H, W)."""
    N, C, H, W = x.shape
    HW = H * W
    assert weight.shape == (1, 2, KSIZE, KSIZE)
    w_flat = weight.reshape(-1).astype(jnp.float32)        # (98,) scalars -> SMEM

    itemsize = jnp.dtype(x.dtype).itemsize
    subl = max(8, 32 // itemsize)                          # sublane multiple per dtype
    lane = _round_up(HW, 128)                              # physical lane width

    # Batch tile: amortize per-step overhead but keep >= 2 parallel grid steps
    # (megacore sharding / v7x two TensorCores) whenever N allows it.
    BN = _largest_divisor_at_most(N, min(8, max(1, N // 2)))

    # Generation-aware scoped VMEM ceiling (v7x: 64 MiB physical, v5e/v6e: 128).
    if vmem_limit_bytes is None:
        cap = _vmem_capacity_bytes()
        vmem_limit_bytes = min(cap * 3 // 4, 64 * 1024 * 1024)
    vmem_limit_bytes = int(vmem_limit_bytes)

    # Padding-aware budget: 2x double-buffered input block + output blocks +
    # the two f32 sum/max scratch planes must stay under the limit w/ headroom.
    out_block = BN * subl * lane * itemsize
    scratch = 2 * _round_up(BN, 8) * lane * 4
    avail = int(vmem_limit_bytes * 0.8) - 2 * out_block - scratch
    per_buf = max(1 << 20, avail // 2)
    per_buf = min(per_buf, 16 * 1024 * 1024)               # diminishing returns past ~16 MiB

    def in_block_bytes(tc):
        return BN * _round_up(tc, subl) * lane * itemsize

    # Channel tile must divide C and be a multiple of the sublane count
    # (or equal C) to satisfy the (8,128) block constraint.
    cands = sorted({d for d in range(subl, C + 1, subl) if C % d == 0} | {C})
    if c_tile is not None:
        fit = [d for d in cands if d <= c_tile]
        cands = fit if fit else cands[:1]
    TC = cands[0]
    for d in cands:
        if in_block_bytes(d) <= per_buf:
            TC = d

    cc_chunk = _largest_divisor_at_most(TC, subl)
    grid = (N // BN, C // TC)

    x_flat = x.reshape(N, C, HW)                           # free layout reshape
    kernel = _make_kernel(C, TC, BN, H, W, cc_chunk)

    cost = pl.CostEstimate(
        flops=int(2 * N * (C + 2 * KK) * HW),
        transcendentals=int(N * HW),
        bytes_accessed=int(N * C * HW * itemsize + N * HW * itemsize + 4 * 2 * KK),
    )

    out = pl.pallas_call(
        kernel,
        out_shape=jax.ShapeDtypeStruct((N, 1, HW), x.dtype),
        grid=grid,
        in_specs=[
            pl.BlockSpec((BN, TC, HW), lambda n, c: (n, c, 0)),
            pl.BlockSpec(memory_space=pltpu.MemorySpace.SMEM),
        ],
        out_specs=pl.BlockSpec((BN, 1, HW), lambda n, c: (n, 0, 0)),
        scratch_shapes=[
            pltpu.VMEM((BN, HW), jnp.float32),   # running channel sum
            pltpu.VMEM((BN, HW), jnp.float32),   # running channel max
        ],
        compiler_params=pltpu.CompilerParams(
            dimension_semantics=("parallel", "arbitrary"),
            vmem_limit_bytes=vmem_limit_bytes,
        ),
        cost_estimate=cost,
    )(x_flat, w_flat)
    return out.reshape(N, 1, H, W)


def _reference(x, weight):
    avg = jnp.mean(x, axis=1, keepdims=True)
    mx = jnp.max(x, axis=1, keepdims=True)
    cat = jnp.concatenate([avg, mx], axis=1)
    y = jax.lax.conv_general_dilated(
        cat, weight, window_strides=(1, 1),
        padding=[(PAD, PAD), (PAD, PAD)],
        dimension_numbers=("NCHW", "OIHW", "NCHW"))
    return jax.nn.sigmoid(y)


if __name__ == "__main__":
    key = jax.random.PRNGKey(0)
    kx, kw, kx2 = jax.random.split(key, 3)

    # Deterministic Conv2d(2, 1, 7, bias=False) weight (kaiming-uniform bound).
    fan_in = 2 * KK
    bound = 1.0 / math.sqrt(fan_in)
    weight = jax.random.uniform(kw, (1, 2, KSIZE, KSIZE),
                                minval=-bound, maxval=bound, dtype=jnp.float32)

    # Primary small test shape.
    N, C, H, W = 2, 4, 16, 16
    x = jax.random.normal(kx, (N, C, H, W), dtype=jnp.float32)
    out = jax.block_until_ready(spatial_attention(x, weight))
    ref = jax.block_until_ready(_reference(x, weight))
    assert out.shape == (N, 1, H, W)
    assert jnp.allclose(out, ref, atol=1e-5, rtol=1e-5), "mismatch vs reference"

    # Also exercise the multi-step channel-reduction (grid-tiled C) path.
    x2 = jax.random.normal(kx2, (2, 16, 16, 16), dtype=jnp.float32)
    out2 = jax.block_until_ready(spatial_attention(x2, weight, c_tile=8))
    ref2 = jax.block_until_ready(_reference(x2, weight))
    assert jnp.allclose(out2, ref2, atol=1e-5, rtol=1e-5), \
        "mismatch vs reference (tiled C)"

    print("KERNEL_OK")
</pallas_src>

<mosaic_0001>
module attributes {stable_mosaic.version = 11 : i64} {
  func.func @kernel(%arg0: i32, %arg1: i32, %arg2: memref<1x4x256xf32, #tpu.memory_space<vmem>>, %arg3: memref<98xf32, #tpu.memory_space<smem>>, %arg4: memref<1x1x256xf32, #tpu.memory_space<vmem>>, %arg5: memref<1x256xf32, #tpu.memory_space<vmem>>, %arg6: memref<1x256xf32, #tpu.memory_space<vmem>>) attributes {dimension_semantics = [#tpu.dimension_semantics<parallel>, #tpu.dimension_semantics<arbitrary>], iteration_bounds = array<i64: 2, 1>, scalar_prefetch = 0 : i64, scratch_operands = 2 : i64, tpu.core_type = #tpu.core_type<tc>, window_params = [{transform_indices = @transform_0, window_bounds = array<i64: 1, 4, 256>}, {transform_indices = @transform_1, window_bounds = array<i64: 98>}, {transform_indices = @transform_2, window_bounds = array<i64: 1, 1, 256>}]} {
    %c0_i32 = arith.constant 0 : i32
    %0 = arith.cmpi eq, %arg1, %c0_i32 : i32
    %1 = arith.extui %0 : i1 to i32
    %c0_i32_0 = arith.constant 0 : i32
    %2 = arith.cmpi ne, %1, %c0_i32_0 : i32
    scf.if %2 {
      %cst_14 = arith.constant 0.000000e+00 : f32
      %15 = vector.broadcast %cst_14 : f32 to vector<1x256xf32>
      %c0_15 = arith.constant 0 : index
      %c0_16 = arith.constant 0 : index
      %16 = vector.load %arg5[%c0_15, %c0_16] : memref<1x256xf32, #tpu.memory_space<vmem>>, vector<1x256xf32>
      tpu.vector_store %arg5[%c0_15, %c0_16], %15 {strides = array<i32>} : memref<1x256xf32, #tpu.memory_space<vmem>>, vector<1x256xf32>,
      %cst_17 = arith.constant 0xFF800000 : f32
      %17 = vector.broadcast %cst_17 : f32 to vector<1x256xf32>
      %c0_18 = arith.constant 0 : index
      %c0_19 = arith.constant 0 : index
      %18 = vector.load %arg6[%c0_18, %c0_19] : memref<1x256xf32, #tpu.memory_space<vmem>>, vector<1x256xf32>
      tpu.vector_store %arg6[%c0_18, %c0_19], %17 {strides = array<i32>} : memref<1x256xf32, #tpu.memory_space<vmem>>, vector<1x256xf32>,
    } else {
    }
    %c0 = arith.constant 0 : index
    %c0_1 = arith.constant 0 : index
    %c0_2 = arith.constant 0 : index
    %3 = vector.load %arg2[%c0, %c0_1, %c0_2] : memref<1x4x256xf32, #tpu.memory_space<vmem>>, vector<1x4x256xf32>
    %cst = arith.constant dense<0.000000e+00> : vector<1x256xf32>
    %4 = vector.multi_reduction <add>, %3, %cst [1] : vector<1x4x256xf32> to vector<1x256xf32>
    %cst_3 = arith.constant dense<0xFF800000> : vector<1x256xf32>
    %5 = vector.multi_reduction <maximumf>, %3, %cst_3 [1] : vector<1x4x256xf32> to vector<1x256xf32>
    %c0_4 = arith.constant 0 : index
    %c0_5 = arith.constant 0 : index
    %6 = vector.load %arg5[%c0_4, %c0_5] : memref<1x256xf32, #tpu.memory_space<vmem>>, vector<1x256xf32>
    %7 = arith.addf %6, %4 : vector<1x256xf32>
    %c0_6 = arith.constant 0 : index
    %c0_7 = arith.constant 0 : index
    %8 = vector.load %arg5[%c0_6, %c0_7] : memref<1x256xf32, #tpu.memory_space<vmem>>, vector<1x256xf32>
    tpu.vector_store %arg5[%c0_6, %c0_7], %7 {strides = array<i32>} : memref<1x256xf32, #tpu.memory_space<vmem>>, vector<1x256xf32>,
    %c0_8 = arith.constant 0 : index
    %c0_9 = arith.constant 0 : index
    %9 = vector.load %arg6[%c0_8, %c0_9] : memref<1x256xf32, #tpu.memory_space<vmem>>, vector<1x256xf32>
    %10 = arith.maximumf %9, %5 : vector<1x256xf32>
    %c0_10 = arith.constant 0 : index
    %c0_11 = arith.constant 0 : index
    %11 = vector.load %arg6[%c0_10, %c0_11] : memref<1x256xf32, #tpu.memory_space<vmem>>, vector<1x256xf32>
    tpu.vector_store %arg6[%c0_10, %c0_11], %10 {strides = array<i32>} : memref<1x256xf32, #tpu.memory_space<vmem>>, vector<1x256xf32>,
    %c0_i32_12 = arith.constant 0 : i32
    %12 = arith.cmpi eq, %arg1, %c0_i32_12 : i32
    %13 = arith.extui %12 : i1 to i32
    %c0_i32_13 = arith.constant 0 : i32
    %14 = arith.cmpi ne, %13, %c0_i32_13 : i32
    scf.if %14 {
      %c0_14 = arith.constant 0 : index
      %c0_15 = arith.constant 0 : index
      %15 = vector.load %arg5[%c0_14, %c0_15] : memref<1x256xf32, #tpu.memory_space<vmem>>, vector<1x256xf32>
      %cst_16 = arith.constant 2.500000e-01 : f32
      %16 = vector.broadcast %cst_16 : f32 to vector<1x256xf32>
      %17 = arith.mulf %15, %16 : vector<1x256xf32>
      %c0_17 = arith.constant 0 : index
      %c0_18 = arith.constant 0 : index
      %18 = vector.load %arg6[%c0_17, %c0_18] : memref<1x256xf32, #tpu.memory_space<vmem>>, vector<1x256xf32>
      %19 = tpu.iota {dimensions = array<i32: 1>} : vector<1x256xi32>
      %c15_i32 = arith.constant 15 : i32
      %20 = vector.broadcast %c15_i32 : i32 to vector<1x256xi32>
      %21 = arith.andi %19, %20 : vector<1x256xi32>
      %c4_i32 = arith.constant 4 : i32
      %22 = vector.broadcast %c4_i32 : i32 to vector<1x256xi32>
      %23 = arith.shrsi %19, %22 : vector<1x256xi32>
      %c-3_i32 = arith.constant -3 : i32
      %24 = vector.broadcast %c-3_i32 : i32 to vector<1x256xi32>
      %25 = arith.addi %21, %24 : vector<1x256xi32>
      %c0_i32_19 = arith.constant 0 : i32
      %26 = vector.broadcast %c0_i32_19 : i32 to vector<1x256xi32>
      %27 = arith.cmpi sge, %25, %26 : vector<1x256xi32>
      %c-3_i32_20 = arith.constant -3 : i32
      %28 = vector.broadcast %c-3_i32_20 : i32 to vector<1x256xi32>
      %29 = arith.addi %21, %28 : vector<1x256xi32>
      %c16_i32 = arith.constant 16 : i32
      %30 = vector.broadcast %c16_i32 : i32 to vector<1x256xi32>
      %31 = arith.cmpi slt, %29, %30 : vector<1x256xi32>
      %32 = arith.andi %27, %31 : vector<1x256xi1>
      %33 = arith.extui %32 : vector<1x256xi1> to vector<1x256xi32>
      %34 = arith.sitofp %33 : vector<1x256xi32> to vector<1x256xf32>
      %c3_i32 = arith.constant 3 : i32
      %35 = tpu.dynamic_rotate %17 by %c3_i32 dim 1 : vector<1x256xf32>, i32 -> vector<1x256xf32>
      %36 = arith.mulf %35, %34 : vector<1x256xf32>
      %c3_i32_21 = arith.constant 3 : i32
      %37 = tpu.dynamic_rotate %18 by %c3_i32_21 dim 1 : vector<1x256xf32>, i32 -> vector<1x256xf32>
      %38 = arith.mulf %37, %34 : vector<1x256xf32>
      %c-2_i32 = arith.constant -2 : i32
      %39 = vector.broadcast %c-2_i32 : i32 to vector<1x256xi32>
      %40 = arith.addi %21, %39 : vector<1x256xi32>
      %c0_i32_22 = arith.constant 0 : i32
      %41 = vector.broadcast %c0_i32_22 : i32 to vector<1x256xi32>
      %42 = arith.cmpi sge, %40, %41 : vector<1x256xi32>
      %c-2_i32_23 = arith.constant -2 : i32
      %43 = vector.broadcast %c-2_i32_23 : i32 to vector<1x256xi32>
      %44 = arith.addi %21, %43 : vector<1x256xi32>
      %c16_i32_24 = arith.constant 16 : i32
      %45 = vector.broadcast %c16_i32_24 : i32 to vector<1x256xi32>
      %46 = arith.cmpi slt, %44, %45 : vector<1x256xi32>
      %47 = arith.andi %42, %46 : vector<1x256xi1>
      %48 = arith.extui %47 : vector<1x256xi1> to vector<1x256xi32>
      %49 = arith.sitofp %48 : vector<1x256xi32> to vector<1x256xf32>
      %c2_i32 = arith.constant 2 : i32
      %50 = tpu.dynamic_rotate %17 by %c2_i32 dim 1 : vector<1x256xf32>, i32 -> vector<1x256xf32>
      %51 = arith.mulf %50, %49 : vector<1x256xf32>
      %c2_i32_25 = arith.constant 2 : i32
      %52 = tpu.dynamic_rotate %18 by %c2_i32_25 dim 1 : vector<1x256xf32>, i32 -> vector<1x256xf32>
      %53 = arith.mulf %52, %49 : vector<1x256xf32>
      %c-1_i32 = arith.constant -1 : i32
      %54 = vector.broadcast %c-1_i32 : i32 to vector<1x256xi32>
      %55 = arith.addi %21, %54 : vector<1x256xi32>
      %c0_i32_26 = arith.constant 0 : i32
      %56 = vector.broadcast %c0_i32_26 : i32 to vector<1x256xi32>
      %57 = arith.cmpi sge, %55, %56 : vector<1x256xi32>
      %c-1_i32_27 = arith.constant -1 : i32
      %58 = vector.broadcast %c-1_i32_27 : i32 to vector<1x256xi32>
      %59 = arith.addi %21, %58 : vector<1x256xi32>
      %c16_i32_28 = arith.constant 16 : i32
      %60 = vector.broadcast %c16_i32_28 : i32 to vector<1x256xi32>
      %61 = arith.cmpi slt, %59, %60 : vector<1x256xi32>
      %62 = arith.andi %57, %61 : vector<1x256xi1>
      %63 = arith.extui %62 : vector<1x256xi1> to vector<1x256xi32>
      %64 = arith.sitofp %63 : vector<1x256xi32> to vector<1x256xf32>
      %c1_i32 = arith.constant 1 : i32
      %65 = tpu.dynamic_rotate %17 by %c1_i32 dim 1 : vector<1x256xf32>, i32 -> vector<1x256xf32>
      %66 = arith.mulf %65, %64 : vector<1x256xf32>
      %c1_i32_29 = arith.constant 1 : i32
      %67 = tpu.dynamic_rotate %18 by %c1_i32_29 dim 1 : vector<1x256xf32>, i32 -> vector<1x256xf32>
      %68 = arith.mulf %67, %64 : vector<1x256xf32>
      %c0_i32_30 = arith.constant 0 : i32
      %69 = vector.broadcast %c0_i32_30 : i32 to vector<1x256xi32>
      %70 = arith.addi %21, %69 : vector<1x256xi32>
      %c0_i32_31 = arith.constant 0 : i32
      %71 = vector.broadcast %c0_i32_31 : i32 to vector<1x256xi32>
      %72 = arith.cmpi sge, %70, %71 : vector<1x256xi32>
      %c0_i32_32 = arith.constant 0 : i32
      %73 = vector.broadcast %c0_i32_32 : i32 to vector<1x256xi32>
      %74 = arith.addi %21, %73 : vector<1x256xi32>
      %c16_i32_33 = arith.constant 16 : i32
      %75 = vector.broadcast %c16_i32_33 : i32 to vector<1x256xi32>
      %76 = arith.cmpi slt, %74, %75 : vector<1x256xi32>
      %77 = arith.andi %72, %76 : vector<1x256xi1>
      %78 = arith.extui %77 : vector<1x256xi1> to vector<1x256xi32>
      %79 = arith.sitofp %78 : vector<1x256xi32> to vector<1x256xf32>
      %80 = arith.mulf %17, %79 : vector<1x256xf32>
      %81 = arith.mulf %18, %79 : vector<1x256xf32>
      %c1_i32_34 = arith.constant 1 : i32
      %82 = vector.broadcast %c1_i32_34 : i32 to vector<1x256xi32>
      %83 = arith.addi %21, %82 : vector<1x256xi32>
      %c0_i32_35 = arith.constant 0 : i32
      %84 = vector.broadcast %c0_i32_35 : i32 to vector<1x256xi32>
      %85 = arith.cmpi sge, %83, %84 : vector<1x256xi32>
      %c1_i32_36 = arith.constant 1 : i32
      %86 = vector.broadcast %c1_i32_36 : i32 to vector<1x256xi32>
      %87 = arith.addi %21, %86 : vector<1x256xi32>
      %c16_i32_37 = arith.constant 16 : i32
      %88 = vector.broadcast %c16_i32_37 : i32 to vector<1x256xi32>
      %89 = arith.cmpi slt, %87, %88 : vector<1x256xi32>
      %90 = arith.andi %85, %89 : vector<1x256xi1>
      %91 = arith.extui %90 : vector<1x256xi1> to vector<1x256xi32>
      %92 = arith.sitofp %91 : vector<1x256xi32> to vector<1x256xf32>
      %c255_i32 = arith.constant 255 : i32
      %93 = tpu.dynamic_rotate %17 by %c255_i32 dim 1 : vector<1x256xf32>, i32 -> vector<1x256xf32>
      %94 = arith.mulf %93, %92 : vector<1x256xf32>
      %c255_i32_38 = arith.constant 255 : i32
      %95 = tpu.dynamic_rotate %18 by %c255_i32_38 dim 1 : vector<1x256xf32>, i32 -> vector<1x256xf32>
      %96 = arith.mulf %95, %92 : vector<1x256xf32>
      %c2_i32_39 = arith.constant 2 : i32
      %97 = vector.broadcast %c2_i32_39 : i32 to vector<1x256xi32>
      %98 = arith.addi %21, %97 : vector<1x256xi32>
      %c0_i32_40 = arith.constant 0 : i32
      %99 = vector.broadcast %c0_i32_40 : i32 to vector<1x256xi32>
      %100 = arith.cmpi sge, %98, %99 : vector<1x256xi32>
      %c2_i32_41 = arith.constant 2 : i32
      %101 = vector.broadcast %c2_i32_41 : i32 to vector<1x256xi32>
      %102 = arith.addi %21, %101 : vector<1x256xi32>
      %c16_i32_42 = arith.constant 16 : i32
      %103 = vector.broadcast %c16_i32_42 : i32 to vector<1x256xi32>
      %104 = arith.cmpi slt, %102, %103 : vector<1x256xi32>
      %105 = arith.andi %100, %104 : vector<1x256xi1>
      %106 = arith.extui %105 : vector<1x256xi1> to vector<1x256xi32>
      %107 = arith.sitofp %106 : vector<1x256xi32> to vector<1x256xf32>
      %c254_i32 = arith.constant 254 : i32
      %108 = tpu.dynamic_rotate %17 by %c254_i32 dim 1 : vector<1x256xf32>, i32 -> vector<1x256xf32>
      %109 = arith.mulf %108, %107 : vector<1x256xf32>
      %c254_i32_43 = arith.constant 254 : i32
      %110 = tpu.dynamic_rotate %18 by %c254_i32_43 dim 1 : vector<1x256xf32>, i32 -> vector<1x256xf32>
      %111 = arith.mulf %110, %107 : vector<1x256xf32>
      %c3_i32_44 = arith.constant 3 : i32
      %112 = vector.broadcast %c3_i32_44 : i32 to vector<1x256xi32>
      %113 = arith.addi %21, %112 : vector<1x256xi32>
      %c0_i32_45 = arith.constant 0 : i32
      %114 = vector.broadcast %c0_i32_45 : i32 to vector<1x256xi32>
      %115 = arith.cmpi sge, %113, %114 : vector<1x256xi32>
      %c3_i32_46 = arith.constant 3 : i32
      %116 = vector.broadcast %c3_i32_46 : i32 to vector<1x256xi32>
      %117 = arith.addi %21, %116 : vector<1x256xi32>
      %c16_i32_47 = arith.constant 16 : i32
      %118 = vector.broadcast %c16_i32_47 : i32 to vector<1x256xi32>
      %119 = arith.cmpi slt, %117, %118 : vector<1x256xi32>
      %120 = arith.andi %115, %119 : vector<1x256xi1>
      %121 = arith.extui %120 : vector<1x256xi1> to vector<1x256xi32>
      %122 = arith.sitofp %121 : vector<1x256xi32> to vector<1x256xf32>
      %c253_i32 = arith.constant 253 : i32
      %123 = tpu.dynamic_rotate %17 by %c253_i32 dim 1 : vector<1x256xf32>, i32 -> vector<1x256xf32>
      %124 = arith.mulf %123, %122 : vector<1x256xf32>
      %c253_i32_48 = arith.constant 253 : i32
      %125 = tpu.dynamic_rotate %18 by %c253_i32_48 dim 1 : vector<1x256xf32>, i32 -> vector<1x256xf32>
      %126 = arith.mulf %125, %122 : vector<1x256xf32>
      %cst_49 = arith.constant 0.000000e+00 : f32
      %127 = vector.broadcast %cst_49 : f32 to vector<1x256xf32>
      %cst_50 = arith.constant 0.000000e+00 : f32
      %128 = vector.broadcast %cst_50 : f32 to vector<1x256xf32>
      %c0_51 = arith.constant 0 : index
      %129 = memref.load %arg3[%c0_51] : memref<98xf32, #tpu.memory_space<smem>>
      %c49 = arith.constant 49 : index
      %130 = memref.load %arg3[%c49] : memref<98xf32, #tpu.memory_space<smem>>
      %131 = vector.broadcast %129 : f32 to vector<1x256xf32>
      %132 = arith.mulf %131, %36 : vector<1x256xf32>
      %133 = arith.addf %128, %132 : vector<1x256xf32>
      %134 = vector.broadcast %130 : f32 to vector<1x256xf32>
      %135 = arith.mulf %134, %38 : vector<1x256xf32>
      %136 = arith.addf %133, %135 : vector<1x256xf32>
      %c1 = arith.constant 1 : index
      %137 = memref.load %arg3[%c1] : memref<98xf32, #tpu.memory_space<smem>>
      %c50 = arith.constant 50 : index
      %138 = memref.load %arg3[%c50] : memref<98xf32, #tpu.memory_space<smem>>
      %139 = vector.broadcast %137 : f32 to vector<1x256xf32>
      %140 = arith.mulf %139, %51 : vector<1x256xf32>
      %141 = arith.addf %136, %140 : vector<1x256xf32>
      %142 = vector.broadcast %138 : f32 to vector<1x256xf32>
      %143 = arith.mulf %142, %53 : vector<1x256xf32>
      %144 = arith.addf %141, %143 : vector<1x256xf32>
      %c2 = arith.constant 2 : index
      %145 = memref.load %arg3[%c2] : memref<98xf32, #tpu.memory_space<smem>>
      %c51 = arith.constant 51 : index
      %146 = memref.load %arg3[%c51] : memref<98xf32, #tpu.memory_space<smem>>
      %147 = vector.broadcast %145 : f32 to vector<1x256xf32>
      %148 = arith.mulf %147, %66 : vector<1x256xf32>
      %149 = arith.addf %144, %148 : vector<1x256xf32>
      %150 = vector.broadcast %146 : f32 to vector<1x256xf32>
      %151 = arith.mulf %150, %68 : vector<1x256xf32>
      %152 = arith.addf %149, %151 : vector<1x256xf32>
      %c3 = arith.constant 3 : index
      %153 = memref.load %arg3[%c3] : memref<98xf32, #tpu.memory_space<smem>>
      %c52 = arith.constant 52 : index
      %154 = memref.load %arg3[%c52] : memref<98xf32, #tpu.memory_space<smem>>
      %155 = vector.broadcast %153 : f32 to vector<1x256xf32>
      %156 = arith.mulf %155, %80 : vector<1x256xf32>
      %157 = arith.addf %152, %156 : vector<1x256xf32>
      %158 = vector.broadcast %154 : f32 to vector<1x256xf32>
      %159 = arith.mulf %158, %81 : vector<1x256xf32>
      %160 = arith.addf %157, %159 : vector<1x256xf32>
      %c4 = arith.constant 4 : index
      %161 = memref.load %arg3[%c4] : memref<98xf32, #tpu.memory_space<smem>>
      %c53 = arith.constant 53 : index
      %162 = memref.load %arg3[%c53] : memref<98xf32, #tpu.memory_space<smem>>
      %163 = vector.broadcast %161 : f32 to vector<1x256xf32>
      %164 = arith.mulf %163, %94 : vector<1x256xf32>
      %165 = arith.addf %160, %164 : vector<1x256xf32>
      %166 = vector.broadcast %162 : f32 to vector<1x256xf32>
      %167 = arith.mulf %166, %96 : vector<1x256xf32>
      %168 = arith.addf %165, %167 : vector<1x256xf32>
      %c5 = arith.constant 5 : index
      %169 = memref.load %arg3[%c5] : memref<98xf32, #tpu.memory_space<smem>>
      %c54 = arith.constant 54 : index
      %170 = memref.load %arg3[%c54] : memref<98xf32, #tpu.memory_space<smem>>
      %171 = vector.broadcast %169 : f32 to vector<1x256xf32>
      %172 = arith.mulf %171, %109 : vector<1x256xf32>
      %173 = arith.addf %168, %172 : vector<1x256xf32>
      %174 = vector.broadcast %170 : f32 to vector<1x256xf32>
      %175 = arith.mulf %174, %111 : vector<1x256xf32>
      %176 = arith.addf %173, %175 : vector<1x256xf32>
      %c6 = arith.constant 6 : index
      %177 = memref.load %arg3[%c6] : memref<98xf32, #tpu.memory_space<smem>>
      %c55 = arith.constant 55 : index
      %178 = memref.load %arg3[%c55] : memref<98xf32, #tpu.memory_space<smem>>
      %179 = vector.broadcast %177 : f32 to vector<1x256xf32>
      %180 = arith.mulf %179, %124 : vector<1x256xf32>
      %181 = arith.addf %176, %180 : vector<1x256xf32>
      %182 = vector.broadcast %178 : f32 to vector<1x256xf32>
      %183 = arith.mulf %182, %126 : vector<1x256xf32>
      %184 = arith.addf %181, %183 : vector<1x256xf32>
      %c-3_i32_52 = arith.constant -3 : i32
      %185 = vector.broadcast %c-3_i32_52 : i32 to vector<1x256xi32>
      %186 = arith.addi %23, %185 : vector<1x256xi32>
      %c0_i32_53 = arith.constant 0 : i32
      %187 = vector.broadcast %c0_i32_53 : i32 to vector<1x256xi32>
      %188 = arith.cmpi sge, %186, %187 : vector<1x256xi32>
      %c-3_i32_54 = arith.constant -3 : i32
      %189 = vector.broadcast %c-3_i32_54 : i32 to vector<1x256xi32>
      %190 = arith.addi %23, %189 : vector<1x256xi32>
      %c16_i32_55 = arith.constant 16 : i32
      %191 = vector.broadcast %c16_i32_55 : i32 to vector<1x256xi32>
      %192 = arith.cmpi slt, %190, %191 : vector<1x256xi32>
      %193 = arith.andi %188, %192 : vector<1x256xi1>
      %194 = arith.extui %193 : vector<1x256xi1> to vector<1x256xi32>
      %195 = arith.sitofp %194 : vector<1x256xi32> to vector<1x256xf32>
      %c48_i32 = arith.constant 48 : i32
      %196 = tpu.dynamic_rotate %184 by %c48_i32 dim 1 : vector<1x256xf32>, i32 -> vector<1x256xf32>
      %197 = arith.mulf %196, %195 : vector<1x256xf32>
      %198 = arith.addf %127, %197 : vector<1x256xf32>
      %cst_56 = arith.constant 0.000000e+00 : f32
      %199 = vector.broadcast %cst_56 : f32 to vector<1x256xf32>
      %c7 = arith.constant 7 : index
      %200 = memref.load %arg3[%c7] : memref<98xf32, #tpu.memory_space<smem>>
      %c56 = arith.constant 56 : index
      %201 = memref.load %arg3[%c56] : memref<98xf32, #tpu.memory_space<smem>>
      %202 = vector.broadcast %200 : f32 to vector<1x256xf32>
      %203 = arith.mulf %202, %36 : vector<1x256xf32>
      %204 = arith.addf %199, %203 : vector<1x256xf32>
      %205 = vector.broadcast %201 : f32 to vector<1x256xf32>
      %206 = arith.mulf %205, %38 : vector<1x256xf32>
      %207 = arith.addf %204, %206 : vector<1x256xf32>
      %c8 = arith.constant 8 : index
      %208 = memref.load %arg3[%c8] : memref<98xf32, #tpu.memory_space<smem>>
      %c57 = arith.constant 57 : index
      %209 = memref.load %arg3[%c57] : memref<98xf32, #tpu.memory_space<smem>>
      %210 = vector.broadcast %208 : f32 to vector<1x256xf32>
      %211 = arith.mulf %210, %51 : vector<1x256xf32>
      %212 = arith.addf %207, %211 : vector<1x256xf32>
      %213 = vector.broadcast %209 : f32 to vector<1x256xf32>
      %214 = arith.mulf %213, %53 : vector<1x256xf32>
      %215 = arith.addf %212, %214 : vector<1x256xf32>
      %c9 = arith.constant 9 : index
      %216 = memref.load %arg3[%c9] : memref<98xf32, #tpu.memory_space<smem>>
      %c58 = arith.constant 58 : index
      %217 = memref.load %arg3[%c58] : memref<98xf32, #tpu.memory_space<smem>>
      %218 = vector.broadcast %216 : f32 to vector<1x256xf32>
      %219 = arith.mulf %218, %66 : vector<1x256xf32>
      %220 = arith.addf %215, %219 : vector<1x256xf32>
      %221 = vector.broadcast %217 : f32 to vector<1x256xf32>
      %222 = arith.mulf %221, %68 : vector<1x256xf32>
      %223 = arith.addf %220, %222 : vector<1x256xf32>
      %c10 = arith.constant 10 : index
      %224 = memref.load %arg3[%c10] : memref<98xf32, #tpu.memory_space<smem>>
      %c59 = arith.constant 59 : index
      %225 = memref.load %arg3[%c59] : memref<98xf32, #tpu.memory_space<smem>>
      %226 = vector.broadcast %224 : f32 to vector<1x256xf32>
      %227 = arith.mulf %226, %80 : vector<1x256xf32>
      %228 = arith.addf %223, %227 : vector<1x256xf32>
      %229 = vector.broadcast %225 : f32 to vector<1x256xf32>
      %230 = arith.mulf %229, %81 : vector<1x256xf32>
      %231 = arith.addf %228, %230 : vector<1x256xf32>
      %c11 = arith.constant 11 : index
      %232 = memref.load %arg3[%c11] : memref<98xf32, #tpu.memory_space<smem>>
      %c60 = arith.constant 60 : index
      %233 = memref.load %arg3[%c60] : memref<98xf32, #tpu.memory_space<smem>>
      %234 = vector.broadcast %232 : f32 to vector<1x256xf32>
      %235 = arith.mulf %234, %94 : vector<1x256xf32>
      %236 = arith.addf %231, %235 : vector<1x256xf32>
      %237 = vector.broadcast %233 : f32 to vector<1x256xf32>
      %238 = arith.mulf %237, %96 : vector<1x256xf32>
      %239 = arith.addf %236, %238 : vector<1x256xf32>
      %c12 = arith.constant 12 : index
      %240 = memref.load %arg3[%c12] : memref<98xf32, #tpu.memory_space<smem>>
      %c61 = arith.constant 61 : index
      %241 = memref.load %arg3[%c61] : memref<98xf32, #tpu.memory_space<smem>>
      %242 = vector.broadcast %240 : f32 to vector<1x256xf32>
      %243 = arith.mulf %242, %109 : vector<1x256xf32>
      %244 = arith.addf %239, %243 : vector<1x256xf32>
      %245 = vector.broadcast %241 : f32 to vector<1x256xf32>
      %246 = arith.mulf %245, %111 : vector<1x256xf32>
      %247 = arith.addf %244, %246 : vector<1x256xf32>
      %c13 = arith.constant 13 : index
      %248 = memref.load %arg3[%c13] : memref<98xf32, #tpu.memory_space<smem>>
      %c62 = arith.constant 62 : index
      %249 = memref.load %arg3[%c62] : memref<98xf32, #tpu.memory_space<smem>>
      %250 = vector.broadcast %248 : f32 to vector<1x256xf32>
      %251 = arith.mulf %250, %124 : vector<1x256xf32>
      %252 = arith.addf %247, %251 : vector<1x256xf32>
      %253 = vector.broadcast %249 : f32 to vector<1x256xf32>
      %254 = arith.mulf %253, %126 : vector<1x256xf32>
      %255 = arith.addf %252, %254 : vector<1x256xf32>
      %c-2_i32_57 = arith.constant -2 : i32
      %256 = vector.broadcast %c-2_i32_57 : i32 to vector<1x256xi32>
      %257 = arith.addi %23, %256 : vector<1x256xi32>
      %c0_i32_58 = arith.constant 0 : i32
      %258 = vector.broadcast %c0_i32_58 : i32 to vector<1x256xi32>
      %259 = arith.cmpi sge, %257, %258 : vector<1x256xi32>
      %c-2_i32_59 = arith.constant -2 : i32
      %260 = vector.broadcast %c-2_i32_59 : i32 to vector<1x256xi32>
      %261 = arith.addi %23, %260 : vector<1x256xi32>
      %c16_i32_60 = arith.constant 16 : i32
      %262 = vector.broadcast %c16_i32_60 : i32 to vector<1x256xi32>
      %263 = arith.cmpi slt, %261, %262 : vector<1x256xi32>
      %264 = arith.andi %259, %263 : vector<1x256xi1>
      %265 = arith.extui %264 : vector<1x256xi1> to vector<1x256xi32>
      %266 = arith.sitofp %265 : vector<1x256xi32> to vector<1x256xf32>
      %c32_i32 = arith.constant 32 : i32
      %267 = tpu.dynamic_rotate %255 by %c32_i32 dim 1 : vector<1x256xf32>, i32 -> vector<1x256xf32>
      %268 = arith.mulf %267, %266 : vector<1x256xf32>
      %269 = arith.addf %198, %268 : vector<1x256xf32>
      %cst_61 = arith.constant 0.000000e+00 : f32
      %270 = vector.broadcast %cst_61 : f32 to vector<1x256xf32>
      %c14 = arith.constant 14 : index
      %271 = memref.load %arg3[%c14] : memref<98xf32, #tpu.memory_space<smem>>
      %c63 = arith.constant 63 : index
      %272 = memref.load %arg3[%c63] : memref<98xf32, #tpu.memory_space<smem>>
      %273 = vector.broadcast %271 : f32 to vector<1x256xf32>
      %274 = arith.mulf %273, %36 : vector<1x256xf32>
      %275 = arith.addf %270, %274 : vector<1x256xf32>
      %276 = vector.broadcast %272 : f32 to vector<1x256xf32>
      %277 = arith.mulf %276, %38 : vector<1x256xf32>
      %278 = arith.addf %275, %277 : vector<1x256xf32>
      %c15 = arith.constant 15 : index
      %279 = memref.load %arg3[%c15] : memref<98xf32, #tpu.memory_space<smem>>
      %c64 = arith.constant 64 : index
      %280 = memref.load %arg3[%c64] : memref<98xf32, #tpu.memory_space<smem>>
      %281 = vector.broadcast %279 : f32 to vector<1x256xf32>
      %282 = arith.mulf %281, %51 : vector<1x256xf32>
      %283 = arith.addf %278, %282 : vector<1x256xf32>
      %284 = vector.broadcast %280 : f32 to vector<1x256xf32>
      %285 = arith.mulf %284, %53 : vector<1x256xf32>
      %286 = arith.addf %283, %285 : vector<1x256xf32>
      %c16 = arith.constant 16 : index
      %287 = memref.load %arg3[%c16] : memref<98xf32, #tpu.memory_space<smem>>
      %c65 = arith.constant 65 : index
      %288 = memref.load %arg3[%c65] : memref<98xf32, #tpu.memory_space<smem>>
      %289 = vector.broadcast %287 : f32 to vector<1x256xf32>
      %290 = arith.mulf %289, %66 : vector<1x256xf32>
      %291 = arith.addf %286, %290 : vector<1x256xf32>
      %292 = vector.broadcast %288 : f32 to vector<1x256xf32>
      %293 = arith.mulf %292, %68 : vector<1x256xf32>
      %294 = arith.addf %291, %293 : vector<1x256xf32>
      %c17 = arith.constant 17 : index
      %295 = memref.load %arg3[%c17] : memref<98xf32, #tpu.memory_space<smem>>
      %c66 = arith.constant 66 : index
      %296 = memref.load %arg3[%c66] : memref<98xf32, #tpu.memory_space<smem>>
      %297 = vector.broadcast %295 : f32 to vector<1x256xf32>
      %298 = arith.mulf %297, %80 : vector<1x256xf32>
      %299 = arith.addf %294, %298 : vector<1x256xf32>
      %300 = vector.broadcast %296 : f32 to vector<1x256xf32>
      %301 = arith.mulf %300, %81 : vector<1x256xf32>
      %302 = arith.addf %299, %301 : vector<1x256xf32>
      %c18 = arith.constant 18 : index
      %303 = memref.load %arg3[%c18] : memref<98xf32, #tpu.memory_space<smem>>
      %c67 = arith.constant 67 : index
      %304 = memref.load %arg3[%c67] : memref<98xf32, #tpu.memory_space<smem>>
      %305 = vector.broadcast %303 : f32 to vector<1x256xf32>
      %306 = arith.mulf %305, %94 : vector<1x256xf32>
      %307 = arith.addf %302, %306 : vector<1x256xf32>
      %308 = vector.broadcast %304 : f32 to vector<1x256xf32>
      %309 = arith.mulf %308, %96 : vector<1x256xf32>
      %310 = arith.addf %307, %309 : vector<1x256xf32>
      %c19 = arith.constant 19 : index
      %311 = memref.load %arg3[%c19] : memref<98xf32, #tpu.memory_space<smem>>
      %c68 = arith.constant 68 : index
      %312 = memref.load %arg3[%c68] : memref<98xf32, #tpu.memory_space<smem>>
      %313 = vector.broadcast %311 : f32 to vector<1x256xf32>
      %314 = arith.mulf %313, %109 : vector<1x256xf32>
      %315 = arith.addf %310, %314 : vector<1x256xf32>
      %316 = vector.broadcast %312 : f32 to vector<1x256xf32>
      %317 = arith.mulf %316, %111 : vector<1x256xf32>
      %318 = arith.addf %315, %317 : vector<1x256xf32>
      %c20 = arith.constant 20 : index
      %319 = memref.load %arg3[%c20] : memref<98xf32, #tpu.memory_space<smem>>
      %c69 = arith.constant 69 : index
      %320 = memref.load %arg3[%c69] : memref<98xf32, #tpu.memory_space<smem>>
      %321 = vector.broadcast %319 : f32 to vector<1x256xf32>
      %322 = arith.mulf %321, %124 : vector<1x256xf32>
      %323 = arith.addf %318, %322 : vector<1x256xf32>
      %324 = vector.broadcast %320 : f32 to vector<1x256xf32>
      %325 = arith.mulf %324, %126 : vector<1x256xf32>
      %326 = arith.addf %323, %325 : vector<1x256xf32>
      %c-1_i32_62 = arith.constant -1 : i32
      %327 = vector.broadcast %c-1_i32_62 : i32 to vector<1x256xi32>
      %328 = arith.addi %23, %327 : vector<1x256xi32>
      %c0_i32_63 = arith.constant 0 : i32
      %329 = vector.broadcast %c0_i32_63 : i32 to vector<1x256xi32>
      %330 = arith.cmpi sge, %328, %329 : vector<1x256xi32>
      %c-1_i32_64 = arith.constant -1 : i32
      %331 = vector.broadcast %c-1_i32_64 : i32 to vector<1x256xi32>
      %332 = arith.addi %23, %331 : vector<1x256xi32>
      %c16_i32_65 = arith.constant 16 : i32
      %333 = vector.broadcast %c16_i32_65 : i32 to vector<1x256xi32>
      %334 = arith.cmpi slt, %332, %333 : vector<1x256xi32>
      %335 = arith.andi %330, %334 : vector<1x256xi1>
      %336 = arith.extui %335 : vector<1x256xi1> to vector<1x256xi32>
      %337 = arith.sitofp %336 : vector<1x256xi32> to vector<1x256xf32>
      %c16_i32_66 = arith.constant 16 : i32
      %338 = tpu.dynamic_rotate %326 by %c16_i32_66 dim 1 : vector<1x256xf32>, i32 -> vector<1x256xf32>
      %339 = arith.mulf %338, %337 : vector<1x256xf32>
      %340 = arith.addf %269, %339 : vector<1x256xf32>
      %cst_67 = arith.constant 0.000000e+00 : f32
      %341 = vector.broadcast %cst_67 : f32 to vector<1x256xf32>
      %c21 = arith.constant 21 : index
      %342 = memref.load %arg3[%c21] : memref<98xf32, #tpu.memory_space<smem>>
      %c70 = arith.constant 70 : index
      %343 = memref.load %arg3[%c70] : memref<98xf32, #tpu.memory_space<smem>>
      %344 = vector.broadcast %342 : f32 to vector<1x256xf32>
      %345 = arith.mulf %344, %36 : vector<1x256xf32>
      %346 = arith.addf %341, %345 : vector<1x256xf32>
      %347 = vector.broadcast %343 : f32 to vector<1x256xf32>
      %348 = arith.mulf %347, %38 : vector<1x256xf32>
      %349 = arith.addf %346, %348 : vector<1x256xf32>
      %c22 = arith.constant 22 : index
      %350 = memref.load %arg3[%c22] : memref<98xf32, #tpu.memory_space<smem>>
      %c71 = arith.constant 71 : index
      %351 = memref.load %arg3[%c71] : memref<98xf32, #tpu.memory_space<smem>>
      %352 = vector.broadcast %350 : f32 to vector<1x256xf32>
      %353 = arith.mulf %352, %51 : vector<1x256xf32>
      %354 = arith.addf %349, %353 : vector<1x256xf32>
      %355 = vector.broadcast %351 : f32 to vector<1x256xf32>
      %356 = arith.mulf %355, %53 : vector<1x256xf32>
      %357 = arith.addf %354, %356 : vector<1x256xf32>
      %c23 = arith.constant 23 : index
      %358 = memref.load %arg3[%c23] : memref<98xf32, #tpu.memory_space<smem>>
      %c72 = arith.constant 72 : index
      %359 = memref.load %arg3[%c72] : memref<98xf32, #tpu.memory_space<smem>>
      %360 = vector.broadcast %358 : f32 to vector<1x256xf32>
      %361 = arith.mulf %360, %66 : vector<1x256xf32>
      %362 = arith.addf %357, %361 : vector<1x256xf32>
      %363 = vector.broadcast %359 : f32 to vector<1x256xf32>
      %364 = arith.mulf %363, %68 : vector<1x256xf32>
      %365 = arith.addf %362, %364 : vector<1x256xf32>
      %c24 = arith.constant 24 : index
      %366 = memref.load %arg3[%c24] : memref<98xf32, #tpu.memory_space<smem>>
      %c73 = arith.constant 73 : index
      %367 = memref.load %arg3[%c73] : memref<98xf32, #tpu.memory_space<smem>>
      %368 = vector.broadcast %366 : f32 to vector<1x256xf32>
      %369 = arith.mulf %368, %80 : vector<1x256xf32>
      %370 = arith.addf %365, %369 : vector<1x256xf32>
      %371 = vector.broadcast %367 : f32 to vector<1x256xf32>
      %372 = arith.mulf %371, %81 : vector<1x256xf32>
      %373 = arith.addf %370, %372 : vector<1x256xf32>
      %c25 = arith.constant 25 : index
      %374 = memref.load %arg3[%c25] : memref<98xf32, #tpu.memory_space<smem>>
      %c74 = arith.constant 74 : index
      %375 = memref.load %arg3[%c74] : memref<98xf32, #tpu.memory_space<smem>>
      %376 = vector.broadcast %374 : f32 to vector<1x256xf32>
      %377 = arith.mulf %376, %94 : vector<1x256xf32>
      %378 = arith.addf %373, %377 : vector<1x256xf32>
      %379 = vector.broadcast %375 : f32 to vector<1x256xf32>
      %380 = arith.mulf %379, %96 : vector<1x256xf32>
      %381 = arith.addf %378, %380 : vector<1x256xf32>
      %c26 = arith.constant 26 : index
      %382 = memref.load %arg3[%c26] : memref<98xf32, #tpu.memory_space<smem>>
      %c75 = arith.constant 75 : index
      %383 = memref.load %arg3[%c75] : memref<98xf32, #tpu.memory_space<smem>>
      %384 = vector.broadcast %382 : f32 to vector<1x256xf32>
      %385 = arith.mulf %384, %109 : vector<1x256xf32>
      %386 = arith.addf %381, %385 : vector<1x256xf32>
      %387 = vector.broadcast %383 : f32 to vector<1x256xf32>
      %388 = arith.mulf %387, %111 : vector<1x256xf32>
      %389 = arith.addf %386, %388 : vector<1x256xf32>
      %c27 = arith.constant 27 : index
      %390 = memref.load %arg3[%c27] : memref<98xf32, #tpu.memory_space<smem>>
      %c76 = arith.constant 76 : index
      %391 = memref.load %arg3[%c76] : memref<98xf32, #tpu.memory_space<smem>>
      %392 = vector.broadcast %390 : f32 to vector<1x256xf32>
      %393 = arith.mulf %392, %124 : vector<1x256xf32>
      %394 = arith.addf %389, %393 : vector<1x256xf32>
      %395 = vector.broadcast %391 : f32 to vector<1x256xf32>
      %396 = arith.mulf %395, %126 : vector<1x256xf32>
      %397 = arith.addf %394, %396 : vector<1x256xf32>
      %c0_i32_68 = arith.constant 0 : i32
      %398 = vector.broadcast %c0_i32_68 : i32 to vector<1x256xi32>
      %399 = arith.addi %23, %398 : vector<1x256xi32>
      %c0_i32_69 = arith.constant 0 : i32
      %400 = vector.broadcast %c0_i32_69 : i32 to vector<1x256xi32>
      %401 = arith.cmpi sge, %399, %400 : vector<1x256xi32>
      %c0_i32_70 = arith.constant 0 : i32
      %402 = vector.broadcast %c0_i32_70 : i32 to vector<1x256xi32>
      %403 = arith.addi %23, %402 : vector<1x256xi32>
      %c16_i32_71 = arith.constant 16 : i32
      %404 = vector.broadcast %c16_i32_71 : i32 to vector<1x256xi32>
      %405 = arith.cmpi slt, %403, %404 : vector<1x256xi32>
      %406 = arith.andi %401, %405 : vector<1x256xi1>
      %407 = arith.extui %406 : vector<1x256xi1> to vector<1x256xi32>
      %408 = arith.sitofp %407 : vector<1x256xi32> to vector<1x256xf32>
      %409 = arith.mulf %397, %408 : vector<1x256xf32>
      %410 = arith.addf %340, %409 : vector<1x256xf32>
      %cst_72 = arith.constant 0.000000e+00 : f32
      %411 = vector.broadcast %cst_72 : f32 to vector<1x256xf32>
      %c28 = arith.constant 28 : index
      %412 = memref.load %arg3[%c28] : memref<98xf32, #tpu.memory_space<smem>>
      %c77 = arith.constant 77 : index
      %413 = memref.load %arg3[%c77] : memref<98xf32, #tpu.memory_space<smem>>
      %414 = vector.broadcast %412 : f32 to vector<1x256xf32>
      %415 = arith.mulf %414, %36 : vector<1x256xf32>
      %416 = arith.addf %411, %415 : vector<1x256xf32>
      %417 = vector.broadcast %413 : f32 to vector<1x256xf32>
      %418 = arith.mulf %417, %38 : vector<1x256xf32>
      %419 = arith.addf %416, %418 : vector<1x256xf32>
      %c29 = arith.constant 29 : index
      %420 = memref.load %arg3[%c29] : memref<98xf32, #tpu.memory_space<smem>>
      %c78 = arith.constant 78 : index
      %421 = memref.load %arg3[%c78] : memref<98xf32, #tpu.memory_space<smem>>
      %422 = vector.broadcast %420 : f32 to vector<1x256xf32>
      %423 = arith.mulf %422, %51 : vector<1x256xf32>
      %424 = arith.addf %419, %423 : vector<1x256xf32>
      %425 = vector.broadcast %421 : f32 to vector<1x256xf32>
      %426 = arith.mulf %425, %53 : vector<1x256xf32>
      %427 = arith.addf %424, %426 : vector<1x256xf32>
      %c30 = arith.constant 30 : index
      %428 = memref.load %arg3[%c30] : memref<98xf32, #tpu.memory_space<smem>>
      %c79 = arith.constant 79 : index
      %429 = memref.load %arg3[%c79] : memref<98xf32, #tpu.memory_space<smem>>
      %430 = vector.broadcast %428 : f32 to vector<1x256xf32>
      %431 = arith.mulf %430, %66 : vector<1x256xf32>
      %432 = arith.addf %427, %431 : vector<1x256xf32>
      %433 = vector.broadcast %429 : f32 to vector<1x256xf32>
      %434 = arith.mulf %433, %68 : vector<1x256xf32>
      %435 = arith.addf %432, %434 : vector<1x256xf32>
      %c31 = arith.constant 31 : index
      %436 = memref.load %arg3[%c31] : memref<98xf32, #tpu.memory_space<smem>>
      %c80 = arith.constant 80 : index
      %437 = memref.load %arg3[%c80] : memref<98xf32, #tpu.memory_space<smem>>
      %438 = vector.broadcast %436 : f32 to vector<1x256xf32>
      %439 = arith.mulf %438, %80 : vector<1x256xf32>
      %440 = arith.addf %435, %439 : vector<1x256xf32>
      %441 = vector.broadcast %437 : f32 to vector<1x256xf32>
      %442 = arith.mulf %441, %81 : vector<1x256xf32>
      %443 = arith.addf %440, %442 : vector<1x256xf32>
      %c32 = arith.constant 32 : index
      %444 = memref.load %arg3[%c32] : memref<98xf32, #tpu.memory_space<smem>>
      %c81 = arith.constant 81 : index
      %445 = memref.load %arg3[%c81] : memref<98xf32, #tpu.memory_space<smem>>
      %446 = vector.broadcast %444 : f32 to vector<1x256xf32>
      %447 = arith.mulf %446, %94 : vector<1x256xf32>
      %448 = arith.addf %443, %447 : vector<1x256xf32>
      %449 = vector.broadcast %445 : f32 to vector<1x256xf32>
      %450 = arith.mulf %449, %96 : vector<1x256xf32>
      %451 = arith.addf %448, %450 : vector<1x256xf32>
      %c33 = arith.constant 33 : index
      %452 = memref.load %arg3[%c33] : memref<98xf32, #tpu.memory_space<smem>>
      %c82 = arith.constant 82 : index
      %453 = memref.load %arg3[%c82] : memref<98xf32, #tpu.memory_space<smem>>
      %454 = vector.broadcast %452 : f32 to vector<1x256xf32>
      %455 = arith.mulf %454, %109 : vector<1x256xf32>
      %456 = arith.addf %451, %455 : vector<1x256xf32>
      %457 = vector.broadcast %453 : f32 to vector<1x256xf32>
      %458 = arith.mulf %457, %111 : vector<1x256xf32>
      %459 = arith.addf %456, %458 : vector<1x256xf32>
      %c34 = arith.constant 34 : index
      %460 = memref.load %arg3[%c34] : memref<98xf32, #tpu.memory_space<smem>>
      %c83 = arith.constant 83 : index
      %461 = memref.load %arg3[%c83] : memref<98xf32, #tpu.memory_space<smem>>
      %462 = vector.broadcast %460 : f32 to vector<1x256xf32>
      %463 = arith.mulf %462, %124 : vector<1x256xf32>
      %464 = arith.addf %459, %463 : vector<1x256xf32>
      %465 = vector.broadcast %461 : f32 to vector<1x256xf32>
      %466 = arith.mulf %465, %126 : vector<1x256xf32>
      %467 = arith.addf %464, %466 : vector<1x256xf32>
      %c1_i32_73 = arith.constant 1 : i32
      %468 = vector.broadcast %c1_i32_73 : i32 to vector<1x256xi32>
      %469 = arith.addi %23, %468 : vector<1x256xi32>
      %c0_i32_74 = arith.constant 0 : i32
      %470 = vector.broadcast %c0_i32_74 : i32 to vector<1x256xi32>
      %471 = arith.cmpi sge, %469, %470 : vector<1x256xi32>
      %c1_i32_75 = arith.constant 1 : i32
      %472 = vector.broadcast %c1_i32_75 : i32 to vector<1x256xi32>
      %473 = arith.addi %23, %472 : vector<1x256xi32>
      %c16_i32_76 = arith.constant 16 : i32
      %474 = vector.broadcast %c16_i32_76 : i32 to vector<1x256xi32>
      %475 = arith.cmpi slt, %473, %474 : vector<1x256xi32>
      %476 = arith.andi %471, %475 : vector<1x256xi1>
      %477 = arith.extui %476 : vector<1x256xi1> to vector<1x256xi32>
      %478 = arith.sitofp %477 : vector<1x256xi32> to vector<1x256xf32>
      %c240_i32 = arith.constant 240 : i32
      %479 = tpu.dynamic_rotate %467 by %c240_i32 dim 1 : vector<1x256xf32>, i32 -> vector<1x256xf32>
      %480 = arith.mulf %479, %478 : vector<1x256xf32>
      %481 = arith.addf %410, %480 : vector<1x256xf32>
      %cst_77 = arith.constant 0.000000e+00 : f32
      %482 = vector.broadcast %cst_77 : f32 to vector<1x256xf32>
      %c35 = arith.constant 35 : index
      %483 = memref.load %arg3[%c35] : memref<98xf32, #tpu.memory_space<smem>>
      %c84 = arith.constant 84 : index
      %484 = memref.load %arg3[%c84] : memref<98xf32, #tpu.memory_space<smem>>
      %485 = vector.broadcast %483 : f32 to vector<1x256xf32>
      %486 = arith.mulf %485, %36 : vector<1x256xf32>
      %487 = arith.addf %482, %486 : vector<1x256xf32>
      %488 = vector.broadcast %484 : f32 to vector<1x256xf32>
      %489 = arith.mulf %488, %38 : vector<1x256xf32>
      %490 = arith.addf %487, %489 : vector<1x256xf32>
      %c36 = arith.constant 36 : index
      %491 = memref.load %arg3[%c36] : memref<98xf32, #tpu.memory_space<smem>>
      %c85 = arith.constant 85 : index
      %492 = memref.load %arg3[%c85] : memref<98xf32, #tpu.memory_space<smem>>
      %493 = vector.broadcast %491 : f32 to vector<1x256xf32>
      %494 = arith.mulf %493, %51 : vector<1x256xf32>
      %495 = arith.addf %490, %494 : vector<1x256xf32>
      %496 = vector.broadcast %492 : f32 to vector<1x256xf32>
      %497 = arith.mulf %496, %53 : vector<1x256xf32>
      %498 = arith.addf %495, %497 : vector<1x256xf32>
      %c37 = arith.constant 37 : index
      %499 = memref.load %arg3[%c37] : memref<98xf32, #tpu.memory_space<smem>>
      %c86 = arith.constant 86 : index
      %500 = memref.load %arg3[%c86] : memref<98xf32, #tpu.memory_space<smem>>
      %501 = vector.broadcast %499 : f32 to vector<1x256xf32>
      %502 = arith.mulf %501, %66 : vector<1x256xf32>
      %503 = arith.addf %498, %502 : vector<1x256xf32>
      %504 = vector.broadcast %500 : f32 to vector<1x256xf32>
      %505 = arith.mulf %504, %68 : vector<1x256xf32>
      %506 = arith.addf %503, %505 : vector<1x256xf32>
      %c38 = arith.constant 38 : index
      %507 = memref.load %arg3[%c38] : memref<98xf32, #tpu.memory_space<smem>>
      %c87 = arith.constant 87 : index
      %508 = memref.load %arg3[%c87] : memref<98xf32, #tpu.memory_space<smem>>
      %509 = vector.broadcast %507 : f32 to vector<1x256xf32>
      %510 = arith.mulf %509, %80 : vector<1x256xf32>
      %511 = arith.addf %506, %510 : vector<1x256xf32>
      %512 = vector.broadcast %508 : f32 to vector<1x256xf32>
      %513 = arith.mulf %512, %81 : vector<1x256xf32>
      %514 = arith.addf %511, %513 : vector<1x256xf32>
      %c39 = arith.constant 39 : index
      %515 = memref.load %arg3[%c39] : memref<98xf32, #tpu.memory_space<smem>>
      %c88 = arith.constant 88 : index
      %516 = memref.load %arg3[%c88] : memref<98xf32, #tpu.memory_space<smem>>
      %517 = vector.broadcast %515 : f32 to vector<1x256xf32>
      %518 = arith.mulf %517, %94 : vector<1x256xf32>
      %519 = arith.addf %514, %518 : vector<1x256xf32>
      %520 = vector.broadcast %516 : f32 to vector<1x256xf32>
      %521 = arith.mulf %520, %96 : vector<1x256xf32>
      %522 = arith.addf %519, %521 : vector<1x256xf32>
      %c40 = arith.constant 40 : index
      %523 = memref.load %arg3[%c40] : memref<98xf32, #tpu.memory_space<smem>>
      %c89 = arith.constant 89 : index
      %524 = memref.load %arg3[%c89] : memref<98xf32, #tpu.memory_space<smem>>
      %525 = vector.broadcast %523 : f32 to vector<1x256xf32>
      %526 = arith.mulf %525, %109 : vector<1x256xf32>
      %527 = arith.addf %522, %526 : vector<1x256xf32>
      %528 = vector.broadcast %524 : f32 to vector<1x256xf32>
      %529 = arith.mulf %528, %111 : vector<1x256xf32>
      %530 = arith.addf %527, %529 : vector<1x256xf32>
      %c41 = arith.constant 41 : index
      %531 = memref.load %arg3[%c41] : memref<98xf32, #tpu.memory_space<smem>>
      %c90 = arith.constant 90 : index
      %532 = memref.load %arg3[%c90] : memref<98xf32, #tpu.memory_space<smem>>
      %533 = vector.broadcast %531 : f32 to vector<1x256xf32>
      %534 = arith.mulf %533, %124 : vector<1x256xf32>
      %535 = arith.addf %530, %534 : vector<1x256xf32>
      %536 = vector.broadcast %532 : f32 to vector<1x256xf32>
      %537 = arith.mulf %536, %126 : vector<1x256xf32>
      %538 = arith.addf %535, %537 : vector<1x256xf32>
      %c2_i32_78 = arith.constant 2 : i32
      %539 = vector.broadcast %c2_i32_78 : i32 to vector<1x256xi32>
      %540 = arith.addi %23, %539 : vector<1x256xi32>
      %c0_i32_79 = arith.constant 0 : i32
      %541 = vector.broadcast %c0_i32_79 : i32 to vector<1x256xi32>
      %542 = arith.cmpi sge, %540, %541 : vector<1x256xi32>
      %c2_i32_80 = arith.constant 2 : i32
      %543 = vector.broadcast %c2_i32_80 : i32 to vector<1x256xi32>
      %544 = arith.addi %23, %543 : vector<1x256xi32>
      %c16_i32_81 = arith.constant 16 : i32
      %545 = vector.broadcast %c16_i32_81 : i32 to vector<1x256xi32>
      %546 = arith.cmpi slt, %544, %545 : vector<1x256xi32>
      %547 = arith.andi %542, %546 : vector<1x256xi1>
      %548 = arith.extui %547 : vector<1x256xi1> to vector<1x256xi32>
      %549 = arith.sitofp %548 : vector<1x256xi32> to vector<1x256xf32>
      %c224_i32 = arith.constant 224 : i32
      %550 = tpu.dynamic_rotate %538 by %c224_i32 dim 1 : vector<1x256xf32>, i32 -> vector<1x256xf32>
      %551 = arith.mulf %550, %549 : vector<1x256xf32>
      %552 = arith.addf %481, %551 : vector<1x256xf32>
      %cst_82 = arith.constant 0.000000e+00 : f32
      %553 = vector.broadcast %cst_82 : f32 to vector<1x256xf32>
      %c42 = arith.constant 42 : index
      %554 = memref.load %arg3[%c42] : memref<98xf32, #tpu.memory_space<smem>>
      %c91 = arith.constant 91 : index
      %555 = memref.load %arg3[%c91] : memref<98xf32, #tpu.memory_space<smem>>
      %556 = vector.broadcast %554 : f32 to vector<1x256xf32>
      %557 = arith.mulf %556, %36 : vector<1x256xf32>
      %558 = arith.addf %553, %557 : vector<1x256xf32>
      %559 = vector.broadcast %555 : f32 to vector<1x256xf32>
      %560 = arith.mulf %559, %38 : vector<1x256xf32>
      %561 = arith.addf %558, %560 : vector<1x256xf32>
      %c43 = arith.constant 43 : index
      %562 = memref.load %arg3[%c43] : memref<98xf32, #tpu.memory_space<smem>>
      %c92 = arith.constant 92 : index
      %563 = memref.load %arg3[%c92] : memref<98xf32, #tpu.memory_space<smem>>
      %564 = vector.broadcast %562 : f32 to vector<1x256xf32>
      %565 = arith.mulf %564, %51 : vector<1x256xf32>
      %566 = arith.addf %561, %565 : vector<1x256xf32>
      %567 = vector.broadcast %563 : f32 to vector<1x256xf32>
      %568 = arith.mulf %567, %53 : vector<1x256xf32>
      %569 = arith.addf %566, %568 : vector<1x256xf32>
      %c44 = arith.constant 44 : index
      %570 = memref.load %arg3[%c44] : memref<98xf32, #tpu.memory_space<smem>>
      %c93 = arith.constant 93 : index
      %571 = memref.load %arg3[%c93] : memref<98xf32, #tpu.memory_space<smem>>
      %572 = vector.broadcast %570 : f32 to vector<1x256xf32>
      %573 = arith.mulf %572, %66 : vector<1x256xf32>
      %574 = arith.addf %569, %573 : vector<1x256xf32>
      %575 = vector.broadcast %571 : f32 to vector<1x256xf32>
      %576 = arith.mulf %575, %68 : vector<1x256xf32>
      %577 = arith.addf %574, %576 : vector<1x256xf32>
      %c45 = arith.constant 45 : index
      %578 = memref.load %arg3[%c45] : memref<98xf32, #tpu.memory_space<smem>>
      %c94 = arith.constant 94 : index
      %579 = memref.load %arg3[%c94] : memref<98xf32, #tpu.memory_space<smem>>
      %580 = vector.broadcast %578 : f32 to vector<1x256xf32>
      %581 = arith.mulf %580, %80 : vector<1x256xf32>
      %582 = arith.addf %577, %581 : vector<1x256xf32>
      %583 = vector.broadcast %579 : f32 to vector<1x256xf32>
      %584 = arith.mulf %583, %81 : vector<1x256xf32>
      %585 = arith.addf %582, %584 : vector<1x256xf32>
      %c46 = arith.constant 46 : index
      %586 = memref.load %arg3[%c46] : memref<98xf32, #tpu.memory_space<smem>>
      %c95 = arith.constant 95 : index
      %587 = memref.load %arg3[%c95] : memref<98xf32, #tpu.memory_space<smem>>
      %588 = vector.broadcast %586 : f32 to vector<1x256xf32>
      %589 = arith.mulf %588, %94 : vector<1x256xf32>
      %590 = arith.addf %585, %589 : vector<1x256xf32>
      %591 = vector.broadcast %587 : f32 to vector<1x256xf32>
      %592 = arith.mulf %591, %96 : vector<1x256xf32>
      %593 = arith.addf %590, %592 : vector<1x256xf32>
      %c47 = arith.constant 47 : index
      %594 = memref.load %arg3[%c47] : memref<98xf32, #tpu.memory_space<smem>>
      %c96 = arith.constant 96 : index
      %595 = memref.load %arg3[%c96] : memref<98xf32, #tpu.memory_space<smem>>
      %596 = vector.broadcast %594 : f32 to vector<1x256xf32>
      %597 = arith.mulf %596, %109 : vector<1x256xf32>
      %598 = arith.addf %593, %597 : vector<1x256xf32>
      %599 = vector.broadcast %595 : f32 to vector<1x256xf32>
      %600 = arith.mulf %599, %111 : vector<1x256xf32>
      %601 = arith.addf %598, %600 : vector<1x256xf32>
      %c48 = arith.constant 48 : index
      %602 = memref.load %arg3[%c48] : memref<98xf32, #tpu.memory_space<smem>>
      %c97 = arith.constant 97 : index
      %603 = memref.load %arg3[%c97] : memref<98xf32, #tpu.memory_space<smem>>
      %604 = vector.broadcast %602 : f32 to vector<1x256xf32>
      %605 = arith.mulf %604, %124 : vector<1x256xf32>
      %606 = arith.addf %601, %605 : vector<1x256xf32>
      %607 = vector.broadcast %603 : f32 to vector<1x256xf32>
      %608 = arith.mulf %607, %126 : vector<1x256xf32>
      %609 = arith.addf %606, %608 : vector<1x256xf32>
      %c3_i32_83 = arith.constant 3 : i32
      %610 = vector.broadcast %c3_i32_83 : i32 to vector<1x256xi32>
      %611 = arith.addi %23, %610 : vector<1x256xi32>
      %c0_i32_84 = arith.constant 0 : i32
      %612 = vector.broadcast %c0_i32_84 : i32 to vector<1x256xi32>
      %613 = arith.cmpi sge, %611, %612 : vector<1x256xi32>
      %c3_i32_85 = arith.constant 3 : i32
      %614 = vector.broadcast %c3_i32_85 : i32 to vector<1x256xi32>
      %615 = arith.addi %23, %614 : vector<1x256xi32>
      %c16_i32_86 = arith.constant 16 : i32
      %616 = vector.broadcast %c16_i32_86 : i32 to vector<1x256xi32>
      %617 = arith.cmpi slt, %615, %616 : vector<1x256xi32>
      %618 = arith.andi %613, %617 : vector<1x256xi1>
      %619 = arith.extui %618 : vector<1x256xi1> to vector<1x256xi32>
      %620 = arith.sitofp %619 : vector<1x256xi32> to vector<1x256xf32>
      %c208_i32 = arith.constant 208 : i32
      %621 = tpu.dynamic_rotate %609 by %c208_i32 dim 1 : vector<1x256xf32>, i32 -> vector<1x256xf32>
      %622 = arith.mulf %621, %620 : vector<1x256xf32>
      %623 = arith.addf %552, %622 : vector<1x256xf32>
      %624 = arith.negf %623 : vector<1x256xf32>
      %625 = math.exp %624 : vector<1x256xf32>
      %cst_87 = arith.constant 1.000000e+00 : f32
      %626 = vector.broadcast %cst_87 : f32 to vector<1x256xf32>
      %627 = arith.addf %626, %625 : vector<1x256xf32>
      %628 = arith.divf %626, %627 : vector<1x256xf32>
      %629 = vector.shape_cast %628 : vector<1x256xf32> to vector<1x1x256xf32>
      %c0_88 = arith.constant 0 : index
      %c0_89 = arith.constant 0 : index
      %c0_90 = arith.constant 0 : index
      %630 = vector.load %arg4[%c0_88, %c0_89, %c0_90] : memref<1x1x256xf32, #tpu.memory_space<vmem>>, vector<1x1x256xf32>
      tpu.vector_store %arg4[%c0_88, %c0_89, %c0_90], %629 {strides = array<i32>} : memref<1x1x256xf32, #tpu.memory_space<vmem>>, vector<1x1x256xf32>,
    } else {
    }
    return
  }
  func.func @transform_0(%arg0: i32, %arg1: i32) -> (i32, i32, i32) {
    %c0_i32 = arith.constant 0 : i32
    %c0_i32_0 = arith.constant 0 : i32
    return %arg0, %arg1, %c0_i32 : i32, i32, i32
  }
  func.func @transform_1(%arg0: i32, %arg1: i32) -> i32 {
    %c0_i32 = arith.constant 0 : i32
    %c0_i32_0 = arith.constant 0 : i32
    return %c0_i32 : i32
  }
  func.func @transform_2(%arg0: i32, %arg1: i32) -> (i32, i32, i32) {
    %c0_i32 = arith.constant 0 : i32
    %c0_i32_0 = arith.constant 0 : i32
    %c0_i32_1 = arith.constant 0 : i32
    return %arg0, %c0_i32, %c0_i32_0 : i32, i32, i32
  }
}

</mosaic_0001>

<llo_original>
// kernel: tpu_custom_call.1
$region0: #{tpu_custom_call.1}
  #allocation0 [shape = 'u32[]', space=smem, size = 0x4, offset = 0x4, fixed_abs, tag = 'smem constant byte address 0x4 - core index']
  #allocation1 [shape = 'u32[144,128]{1,0:T(1,128)}', space=vmem, size = 0x12000, scoped, tag = 'internal scratch']
  #allocation2 [shape = 'f32[1,256]{1,0:T(1,128)}', space=vmem, size = 0x400, scoped, tag = 'scratch operand']
  #allocation3 [shape = 'f32[1,256]{1,0:T(1,128)}', space=vmem, size = 0x400, scoped, tag = 'scratch operand']
  %s0 = inlined_call_operand.hbm [shape: f32[2,4,256], index: 0, kind: input, shape index: {}]
  %s1 = inlined_call_operand.vmem [shape: f32[98], index: 1, kind: input, shape index: {}]
  %s2 = inlined_call_operand.hbm [shape: f32[2,1,256], index: 2, kind: output, shape index: {}]
  %s3 = sld [smem:[#allocation0]]
  $region57: #{tpu_custom_call.1} parent=0
    _
  %s5 = ssub.s32 1, %s3
  %s6 = scalar_select 0, %s5, %s3
  $region1: #{tpu_custom_call.1} parent=0
    #allocation4 [shape = 'u8[8192]{0}', space=vmem, size = 0x2000, scoped, tag = 'input window, operand 0']
    #allocation5 [shape = 's32[2]{0}', space=sflag, size = 0x8, scoped, tag = 'scoped memory for tpu_custom_call.1']
    #allocation6 [shape = 's32[2]{0}', space=sflag, size = 0x8, scoped, tag = 'scoped memory for tpu_custom_call.1']
    #allocation7 [shape = 's32[2]{0}', space=sflag, size = 0x8, scoped, tag = 'scoped memory for tpu_custom_call.1']
    #allocation8 [shape = 'u8[512]{0}', space=smem, size = 0x200, scoped, tag = 'input window, operand 1, single buffered']
    #allocation9 [shape = 'u8[2048]{0}', space=vmem, size = 0x800, scoped, tag = 'output window, operand 0']
    %7 = vsyncpa [#allocation5], 0
    %s8 = scalar_lea.sflag [#allocation5], 1
    %9 = vsyncpa %s8, 0
    %10 = vsyncpa [#allocation7], 0
    %11 = vsyncpa [#allocation6], 0
    %s12 = scalar_lea.sflag [#allocation6], 1
    %13 = vsyncpa %s12, 0
    loop: start=0, step=1, limit=4
    $region2: #{tpu_custom_call.1} parent=1 // loop_pre_header
      _
    $region3: #{tpu_custom_call.1} parent=1 // loop_header
      %s15 = sphi 0, %s19
      %p16 = scmp.ge.s32.totalorder %s15, 4
      %s22 = sphi 0, %s34
      %s23 = sphi 0, %s30
      %s24 = sphi 0, %s22
      %s25 = sphi 0, %s23
      %s26 = sphi 0, %s24
      %s27 = sphi 0, %s25
      %s39 = sphi 0, %s41
      %s42 = sphi 0, %s39
      %s43 = sphi 0, %s42
      %s59 = sphi 0, %s43
      %s63 = sphi 0, %s63
      %s65 = sphi 0, %s63
      %s66 = sphi 0, %s65
      %s80 = sphi 0, %s66
      %s86 = sphi 0, %s88
      %s89 = sphi 0, %s86
      %s90 = sphi 0, %s89
      %s106 = sphi 0, %s90
    $region4: #{tpu_custom_call.1} parent=1 // loop_header_branch
      %18 = sbr.rel (%p16) target = $region8
    $region5: #{tpu_custom_call.1} parent=1 // loop_body
      %s20 = ssub.s32 %s15, 1
      %s21 = ssub.s32 %s15, 2
      %s28 = sadd.s32 1, %s23
      %p29 = scmp.ge.s32.totalorder %s28, 1
      %s30 = scalar_select %p29, 0, %s28
      %s31 = sadd.s32 1, %s22
      %s32 = scalar_select %p29, %s31, %s22
      %p33 = scmp.ge.s32.totalorder %s32, 2
      %s34 = scalar_select %p33, 0, %s32
      %s35 = ssub.s32 %s22, %s34
      %s36 = ssub.s32 %s23, %s30
      %s37 = sor.u32 %s35, %s36
      %p38 = scmp.eq.s32.totalorder %s37, 0
      %s40 = sadd.s32 %s39, 1
      %s41 = scalar_select %p38, %s39, %s40
      %p44 = pneg %p38
      %p45 = scmp.eq.s32.totalorder %s15, 1
      %p46 = por %p44, %p45
      %p47 = scmp.ne.s32.totalorder %s39, %s42
      %p48 = scmp.eq.s32.totalorder %s15, 0
      %p49 = por %p47, %p48
      %p50 = scmp.ne.s32.totalorder %s39, %s42
      %p51 = scmp.eq.s32.totalorder %s20, 1
      %p52 = por %p50, %p51
      %p53 = scmp.ne.s32.totalorder %s42, %s43
      %p54 = scmp.eq.s32.totalorder %s20, 0
      %p55 = por %p53, %p54
      %p56 = scmp.ne.s32.totalorder %s42, %s43
      %p57 = scmp.eq.s32.totalorder %s21, 1
      %p58 = por %p56, %p57
      %p60 = scmp.ne.s32.totalorder %s43, %s59
      %p61 = scmp.eq.s32.totalorder %s21, 0
      %p62 = por %p60, %p61
      %s64 = sadd.s32 %s63, 1
      %p67 = scmp.eq.s32.totalorder %s15, 1
      %p68 = scmp.ne.s32.totalorder %s63, %s65
      %p69 = scmp.eq.s32.totalorder %s15, 0
      %p70 = por %p68, %p69
      %p71 = scmp.ne.s32.totalorder %s63, %s65
      %p72 = scmp.eq.s32.totalorder %s20, 1
      %p73 = por %p71, %p72
      %p74 = scmp.ne.s32.totalorder %s65, %s66
      %p75 = scmp.eq.s32.totalorder %s20, 0
      %p76 = por %p74, %p75
      %p77 = scmp.ne.s32.totalorder %s65, %s66
      %p78 = scmp.eq.s32.totalorder %s21, 1
      %p79 = por %p77, %p78
      %p81 = scmp.ne.s32.totalorder %s66, %s80
      %p82 = scmp.eq.s32.totalorder %s21, 0
      %p83 = por %p81, %p82
      %s84 = ssub.s32 %s22, %s34
      %p85 = scmp.eq.s32.totalorder %s84, 0
      %s87 = sadd.s32 %s86, 1
      %s88 = scalar_select %p85, %s86, %s87
      %p91 = pneg %p85
      %p92 = scmp.eq.s32.totalorder %s15, 1
      %p93 = por %p91, %p92
      %p94 = scmp.ne.s32.totalorder %s86, %s89
      %p95 = scmp.eq.s32.totalorder %s15, 0
      %p96 = por %p94, %p95
      %p97 = scmp.ne.s32.totalorder %s86, %s89
      %p98 = scmp.eq.s32.totalorder %s20, 1
      %p99 = por %p97, %p98
      %p100 = scmp.ne.s32.totalorder %s89, %s90
      %p101 = scmp.eq.s32.totalorder %s20, 0
      %p102 = por %p100, %p101
      %p103 = scmp.ne.s32.totalorder %s89, %s90
      %p104 = scmp.eq.s32.totalorder %s21, 1
      %p105 = por %p103, %p104
      %p107 = scmp.ne.s32.totalorder %s90, %s106
      %p108 = scmp.eq.s32.totalorder %s21, 0
      %p109 = por %p107, %p108
      %p110 = scmp.le.s32.totalorder 1, %s15
      %p111 = scmp.lt.s32.totalorder %s15, 3
      %p112 = pnand %p110, %p111
      %p113 = pneg %p112
      // Predicated region
      $region9: #{tpu_custom_call.1} parent=5 // pred_check
        _
      $region10: #{tpu_custom_call.1} parent=5 // pred_check_branch
        %115 = sbr.rel (%p112) target = $region12
      $region11: #{tpu_custom_call.1} parent=5 // pred_region
        %s116 = ssub.s32 %s15, 1
        // Predicated region
        $region13: #{tpu_custom_call.1} parent=11 // pred_check
          %p117 = pneg %p76
        $region14: #{tpu_custom_call.1} parent=11 // pred_check_branch
          %119 = sbr.rel (%p117) target = $region16
        $region15: #{tpu_custom_call.1} parent=11 // pred_region
          %s121 = ssub.s32 16, 16
          %122 = vsyncadd [#allocation7], %s121
          %s124 = sshll.u32 %s1, 4
          %s125 = int_to_ptr.vmem [resolvable:$true] %s124
          %127 = dma.vmem_to_smem %s125, 16, [#allocation8], [#allocation7]
        $region16: #{tpu_custom_call.1} parent=11 // pred_fallthru
          _
      $region12: #{tpu_custom_call.1} parent=5 // pred_fallthru
        _
      %p128 = scmp.lt.s32.totalorder %s15, 2
      // Predicated region
      $region17: #{tpu_custom_call.1} parent=5 // pred_check
        %p129 = pneg %p128
      $region18: #{tpu_custom_call.1} parent=5 // pred_check_branch
        %131 = sbr.rel (%p129) target = $region20
      $region19: #{tpu_custom_call.1} parent=5 // pred_region
        // Predicated region
        $region21: #{tpu_custom_call.1} parent=19 // pred_check
          %p132 = pneg %p49
        $region22: #{tpu_custom_call.1} parent=19 // pred_check_branch
          %134 = sbr.rel (%p132) target = $region24
        $region23: #{tpu_custom_call.1} parent=19 // pred_region
          %s135 = sand.u32 %s39, 1
          %s136 = scalar_lea.sflag [#allocation5], %s135
          %s137 = sand.u32 %s39, 1
          %s138 = smul.addr %s137, 8
          %s139 = scalar_lea.vmem [#allocation4], %s138
          %s141 = ssub.s32 128, 128
          %142 = vsyncadd %s136, %s141
          %s143 = smul.addr %s23, 2
          %s144 = smul.addr %s22, 2
          %s145 = sadd.s32 %s143, %s144
          %s146 = smul.addr %s145, 64
          %s147 = scalar_lea.hbm %s0, %s146
          %s149 = sshll.u32 %s139, 4
          %s150 = int_to_ptr.vmem [resolvable:$true] %s149
          %152 = dma.hbm_to_vmem [thread:$0]  %s147, 128, %s150, %s136
        $region24: #{tpu_custom_call.1} parent=19 // pred_fallthru
          _
      $region20: #{tpu_custom_call.1} parent=5 // pred_fallthru
        _
      %p153 = scmp.le.s32.totalorder 1, %s15
      %p154 = scmp.lt.s32.totalorder %s15, 3
      %p155 = pnand %p153, %p154
      %p156 = pneg %p155
      // Predicated region
      $region25: #{tpu_custom_call.1} parent=5 // pred_check
        _
      $region26: #{tpu_custom_call.1} parent=5 // pred_check_branch
        %158 = sbr.rel (%p155) target = $region28
      $region27: #{tpu_custom_call.1} parent=5 // pred_region
        %s159 = ssub.s32 %s15, 1
        %s160 = sand.u32 %s42, 1
        %s161 = scalar_lea.sflag [#allocation5], %s160
        %s162 = sand.u32 %s42, 1
        %s163 = smul.addr %s162, 8
        %s164 = scalar_lea.vmem [#allocation4], %s163
        // Predicated region
        $region29: #{tpu_custom_call.1} parent=27 // pred_check
          %p165 = pneg %p55
        $region30: #{tpu_custom_call.1} parent=27 // pred_check_branch
          %167 = sbr.rel (%p165) target = $region32
        $region31: #{tpu_custom_call.1} parent=27 // pred_region
          %168 = dma.done %s161, 128
        $region32: #{tpu_custom_call.1} parent=27 // pred_fallthru
          _
        // Predicated region
        $region33: #{tpu_custom_call.1} parent=27 // pred_check
          %p169 = pneg %p76
        $region34: #{tpu_custom_call.1} parent=27 // pred_check_branch
          %171 = sbr.rel (%p169) target = $region36
        $region35: #{tpu_custom_call.1} parent=27 // pred_region
          %172 = dma.done [#allocation7], 16
        $region36: #{tpu_custom_call.1} parent=27 // pred_fallthru
          _
        %173 = sfence
        %s174 = sand.u32 %s42, 1
        %s175 = scalar_lea.sflag [#allocation5], %s174
        %s176 = sand.u32 %s42, 1
        %s177 = smul.addr %s176, 8
        %s178 = scalar_lea.vmem [#allocation4], %s177
        %p179 = pneg %p55
        %p180 = pneg %p52
        %p181 = pneg %p76
        %p182 = pneg %p73
        %p183 = pneg %p102
        %p184 = pneg %p99
        %s185 = sand.u32 %s89, 1
        %s186 = scalar_lea.sflag [#allocation6], %s185
        %s187 = sand.u32 %s89, 1
        %s188 = smul.addr %s187, 2
        %s189 = scalar_lea.vmem [#allocation9], %s188
        %p190 = scmp.eq.s32.totalorder %s25, 0
        // Predicated region
        $region37: #{tpu_custom_call.1} parent=27 // pred_check
          %p191 = pneg %p190
        $region38: #{tpu_custom_call.1} parent=27 // pred_check_branch
          %193 = sbr.rel (%p191) target = $region40
        $region39: #{tpu_custom_call.1} parent=27 // pred_region
          %v194 = vlaneseq
          %vm195 = vcmp.ge.s32.totalorder %v194, 0
          %vm196 = vcmp.lt.s32.totalorder %v194, 256
          %vm197 = vmand %vm195, %vm196
          %198 = vst.msk [vmem:[#allocation2] sm:$0x3] %vm197, 0.0
          %199 = vst.msk [vmem:[#allocation3] sm:$0x3] %vm197, -inf
        $region40: #{tpu_custom_call.1} parent=27 // pred_fallthru
          _
        %v200 = vld [vmem:[%s164] sm:$0xff]
        %v202 = vcombine.high %v200, %v200
        %vm204 = vcmask 1043456
        %v205 = vsel %vm204, %v200, 0.0
        %v206 = vrot.slane %v205, 4
        %v207 = vadd.f32 %v205, %v206
        %v208 = vrot.slane %v207, 2
        %v209 = vadd.f32 %v207, %v208
        %v210 = vrot.slane %v209, 1
        %v211 = vadd.f32 %v209, %v210
        %v212 = vsel %vm204, %v202, 0.0
        %v213 = vrot.slane %v212, 4
        %v214 = vadd.f32 %v212, %v213
        %v215 = vrot.slane %v214, 2
        %v216 = vadd.f32 %v214, %v215
        %v217 = vrot.slane %v216, 1
        %v218 = vadd.f32 %v216, %v217
        %v219 = vsel %vm204, %v200, -inf
        %v220 = vrot.slane %v219, 4
        %v221 = vmax.f32 %v219, %v220
        %v222 = vrot.slane %v221, 2
        %v223 = vmax.f32 %v221, %v222
        %v224 = vrot.slane %v223, 1
        %v225 = vmax.f32 %v223, %v224
        %v226 = vsel %vm204, %v202, -inf
        %v227 = vrot.slane %v226, 4
        %v228 = vmax.f32 %v226, %v227
        %v229 = vrot.slane %v228, 2
        %v230 = vmax.f32 %v228, %v229
        %v231 = vrot.slane %v230, 1
        %v232 = vmax.f32 %v230, %v231
        %v233 = vld [vmem:[#allocation2] sm:$0x3]
        %v236 = vcombine.low %v211, %v218
        %v238 = vunpack.c.l.s4 1966171168
        %v239 = vunpack.c.0.s8 %v238
        %v240 = vlaneseq
        %v241 = vshrl.u32 %v240, 7
        %v242 = vsub.s32 %v239, %v241
        %v243 = vrot.slane %v236, %v242
        %v245 = vunpack.c.l.s4 1966171168
        %v246 = vunpack.c.0.s8 %v245
        %v247 = vlaneseq
        %v248 = vshrl.u32 %v247, 7
        %v249 = vsub.s32 %v246, %v248
        %v250 = vrot.slane %v243, %v249
        %v252 = vadd.f32 %v233, %v250
        %v253 = vlaneseq
        %vm254 = vcmp.ge.s32.totalorder %v253, 0
        %vm255 = vcmp.lt.s32.totalorder %v253, 256
        %vm256 = vmand %vm254, %vm255
        %257 = vst.msk [vmem:[#allocation2] sm:$0x3] %vm256, %v252
        %v258 = vld [vmem:[#allocation3] sm:$0x3]
        %v261 = vcombine.low %v225, %v232
        %v263 = vunpack.c.l.s4 1966171168
        %v264 = vunpack.c.0.s8 %v263
        %v265 = vlaneseq
        %v266 = vshrl.u32 %v265, 7
        %v267 = vsub.s32 %v264, %v266
        %v268 = vrot.slane %v261, %v267
        %v270 = vunpack.c.l.s4 1966171168
        %v271 = vunpack.c.0.s8 %v270
        %v272 = vlaneseq
        %v273 = vshrl.u32 %v272, 7
        %v274 = vsub.s32 %v271, %v273
        %v275 = vrot.slane %v268, %v274
        %v277 = vmax.f32 %v258, %v275
        %278 = vst.msk [vmem:[#allocation3] sm:$0x3] %vm256, %v277
        // Predicated region
        $region41: #{tpu_custom_call.1} parent=27 // pred_check
          %p279 = pneg %p190
        $region42: #{tpu_custom_call.1} parent=27 // pred_check_branch
          %281 = sbr.rel (%p279) target = $region44
        $region43: #{tpu_custom_call.1} parent=27 // pred_region
          %v282 = vld [vmem:[#allocation2] sm:$0x3]
          %v283 = vmul.f32 %v282, 0.25
          %v284 = vld [vmem:[#allocation3] sm:$0x3]
          %v285 = vlaneseq
          %v286 = vand.u32 %v285, 127
          %v287 = vadd.s32 %v286, 128
          %v288 = vand.u32 %v286, 15
          %v289 = vand.u32 %v287, 15
          %v290 = vshra.s32 %v286, 4
          %v291 = vshra.s32 %v287, 4
          %v292 = vadd.s32 %v288, 4294967293
          %v293 = vadd.s32 %v289, 4294967293
          %vm294 = vcmp.ge.s32.totalorder %v292, 0
          %vm295 = vcmp.ge.s32.totalorder %v293, 0
          %vm296 = vcmp.lt.s32.totalorder %v292, 16
          %vm297 = vcmp.lt.s32.totalorder %v293, 16
          %vm298 = vmand %vm294, %vm296
          %vm299 = vmand %vm295, %vm297
          %v300 = vsel %vm298, 1, 0
          %v301 = vsel %vm299, 1, 0
          %v302 = vcvt.s32.f32 %v300
          %v303 = vcvt.s32.f32 %v301
          %v305 = vlaneseq
          %v306 = vshrl.u32 %v305, 7
          %v307 = vsub.s32 0, %v306
          %v308 = vrot.slane %v283, %v307
          %v309 = vlaneseq
          %v310 = vshrl.u32 %v309, 7
          %v311 = vsub.s32 1, %v310
          %v312 = vrot.slane %v283, %v311
          %315 = vrot.lane.b32.xlu0 %v308, 3
          %v316 = vpop.permute.xlu0 %315
          %317 = vrot.lane.b32.xlu0 %v312, 3
          %v318 = vpop.permute.xlu0 %317
          %vm319 = vcmp.lt.s32.totalorder %v286, 3
          %v320 = vsel %vm319, %v316, %v318
          %v321 = vsel %vm319, %v318, %v316
          %v322 = vmul.f32 %v321, %v302
          %v323 = vmul.f32 %v320, %v303
          %v325 = vlaneseq
          %v326 = vshrl.u32 %v325, 7
          %v327 = vsub.s32 0, %v326
          %v328 = vrot.slane %v284, %v327
          %v329 = vlaneseq
          %v330 = vshrl.u32 %v329, 7
          %v331 = vsub.s32 1, %v330
          %v332 = vrot.slane %v284, %v331
          %335 = vrot.lane.b32.xlu0 %v328, 3
          %v336 = vpop.permute.xlu0 %335
          %337 = vrot.lane.b32.xlu0 %v332, 3
          %v338 = vpop.permute.xlu0 %337
          %v339 = vsel %vm319, %v336, %v338
          %v340 = vsel %vm319, %v338, %v336
          %v341 = vmul.f32 %v340, %v302
          %v342 = vmul.f32 %v339, %v303
          %v343 = vadd.s32 %v288, 4294967294
          %v344 = vadd.s32 %v289, 4294967294
          %vm345 = vcmp.ge.s32.totalorder %v343, 0
          %vm346 = vcmp.ge.s32.totalorder %v344, 0
          %vm347 = vcmp.lt.s32.totalorder %v343, 16
          %vm348 = vcmp.lt.s32.totalorder %v344, 16
          %vm349 = vmand %vm345, %vm347
          %vm350 = vmand %vm346, %vm348
          %v351 = vsel %vm349, 1, 0
          %v352 = vsel %vm350, 1, 0
          %v353 = vcvt.s32.f32 %v351
          %v354 = vcvt.s32.f32 %v352
          %355 = vrot.lane.b32.xlu0 %v308, 2
          %v356 = vpop.permute.xlu0 %355
          %357 = vrot.lane.b32.xlu0 %v312, 2
          %v358 = vpop.permute.xlu0 %357
          %vm359 = vcmp.lt.s32.totalorder %v286, 2
          %v360 = vsel %vm359, %v356, %v358
          %v361 = vsel %vm359, %v358, %v356
          %v362 = vmul.f32 %v361, %v353
          %v363 = vmul.f32 %v360, %v354
          %364 = vrot.lane.b32.xlu0 %v328, 2
          %v365 = vpop.permute.xlu0 %364
          %366 = vrot.lane.b32.xlu0 %v332, 2
          %v367 = vpop.permute.xlu0 %366
          %v368 = vsel %vm359, %v365, %v367
          %v369 = vsel %vm359, %v367, %v365
          %v370 = vmul.f32 %v369, %v353
          %v371 = vmul.f32 %v368, %v354
          %v372 = vadd.s32 %v288, 4294967295
          %v373 = vadd.s32 %v289, 4294967295
          %vm374 = vcmp.ge.s32.totalorder %v372, 0
          %vm375 = vcmp.ge.s32.totalorder %v373, 0
          %vm376 = vcmp.lt.s32.totalorder %v372, 16
          %vm377 = vcmp.lt.s32.totalorder %v373, 16
          %vm378 = vmand %vm374, %vm376
          %vm379 = vmand %vm375, %vm377
          %v380 = vsel %vm378, 1, 0
          %v381 = vsel %vm379, 1, 0
          %v382 = vcvt.s32.f32 %v380
          %v383 = vcvt.s32.f32 %v381
          %384 = vrot.lane.b32.xlu0 %v308, 1
          %v385 = vpop.permute.xlu0 %384
          %386 = vrot.lane.b32.xlu0 %v312, 1
          %v387 = vpop.permute.xlu0 %386
          %vm388 = vcmp.lt.s32.totalorder %v286, 1
          %v389 = vsel %vm388, %v385, %v387
          %v390 = vsel %vm388, %v387, %v385
          %v391 = vmul.f32 %v390, %v382
          %v392 = vmul.f32 %v389, %v383
          %393 = vrot.lane.b32.xlu0 %v328, 1
          %v394 = vpop.permute.xlu0 %393
          %395 = vrot.lane.b32.xlu0 %v332, 1
          %v396 = vpop.permute.xlu0 %395
          %v397 = vsel %vm388, %v394, %v396
          %v398 = vsel %vm388, %v396, %v394
          %v399 = vmul.f32 %v398, %v382
          %v400 = vmul.f32 %v397, %v383
          %vm401 = vcmp.ge.s32.totalorder %v288, 0
          %vm402 = vcmp.ge.s32.totalorder %v289, 0
          %vm403 = vcmp.lt.s32.totalorder %v288, 16
          %vm404 = vcmp.lt.s32.totalorder %v289, 16
          %vm405 = vmand %vm401, %vm403
          %vm406 = vmand %vm402, %vm404
          %v407 = vsel %vm405, 1, 0
          %v408 = vsel %vm406, 1, 0
          %v409 = vcvt.s32.f32 %v407
          %v410 = vcvt.s32.f32 %v408
          %v413 = vcombine.low %v409, %v410
          %v415 = vunpack.c.l.s4 1966171168
          %v416 = vunpack.c.0.s8 %v415
          %v417 = vlaneseq
          %v418 = vshrl.u32 %v417, 7
          %v419 = vsub.s32 %v416, %v418
          %v420 = vrot.slane %v413, %v419
          %v422 = vunpack.c.l.s4 1966171168
          %v423 = vunpack.c.0.s8 %v422
          %v424 = vlaneseq
          %v425 = vshrl.u32 %v424, 7
          %v426 = vsub.s32 %v423, %v425
          %v427 = vrot.slane %v420, %v426
          %v429 = vmul.f32 %v283, %v427
          %v430 = vmul.f32 %v284, %v427
          %v431 = vadd.s32 %v288, 1
          %v432 = vadd.s32 %v289, 1
          %vm433 = vcmp.ge.s32.totalorder %v431, 0
          %vm434 = vcmp.ge.s32.totalorder %v432, 0
          %vm435 = vcmp.lt.s32.totalorder %v431, 16
          %vm436 = vcmp.lt.s32.totalorder %v432, 16
          %vm437 = vmand %vm433, %vm435
          %vm438 = vmand %vm434, %vm436
          %v439 = vsel %vm437, 1, 0
          %v440 = vsel %vm438, 1, 0
          %v441 = vcvt.s32.f32 %v439
          %v442 = vcvt.s32.f32 %v440
          %443 = vrot.lane.b32.xlu0 %v308, 127
          %v444 = vpop.permute.xlu0 %443
          %445 = vrot.lane.b32.xlu0 %v312, 127
          %v446 = vpop.permute.xlu0 %445
          %vm447 = vcmp.lt.s32.totalorder %v286, 127
          %v448 = vsel %vm447, %v444, %v446
          %v449 = vsel %vm447, %v446, %v444
          %v450 = vmul.f32 %v448, %v441
          %v451 = vmul.f32 %v449, %v442
          %452 = vrot.lane.b32.xlu0 %v328, 127
          %v453 = vpop.permute.xlu0 %452
          %454 = vrot.lane.b32.xlu0 %v332, 127
          %v455 = vpop.permute.xlu0 %454
          %v456 = vsel %vm447, %v453, %v455
          %v457 = vsel %vm447, %v455, %v453
          %v458 = vmul.f32 %v456, %v441
          %v459 = vmul.f32 %v457, %v442
          %v460 = vadd.s32 %v288, 2
          %v461 = vadd.s32 %v289, 2
          %vm462 = vcmp.ge.s32.totalorder %v460, 0
          %vm463 = vcmp.ge.s32.totalorder %v461, 0
          %vm464 = vcmp.lt.s32.totalorder %v460, 16
          %vm465 = vcmp.lt.s32.totalorder %v461, 16
          %vm466 = vmand %vm462, %vm464
          %vm467 = vmand %vm463, %vm465
          %v468 = vsel %vm466, 1, 0
          %v469 = vsel %vm467, 1, 0
          %v470 = vcvt.s32.f32 %v468
          %v471 = vcvt.s32.f32 %v469
          %472 = vrot.lane.b32.xlu0 %v308, 126
          %v473 = vpop.permute.xlu0 %472
          %474 = vrot.lane.b32.xlu0 %v312, 126
          %v475 = vpop.permute.xlu0 %474
          %vm476 = vcmp.lt.s32.totalorder %v286, 126
          %v477 = vsel %vm476, %v473, %v475
          %v478 = vsel %vm476, %v475, %v473
          %v479 = vmul.f32 %v477, %v470
          %v480 = vmul.f32 %v478, %v471
          %481 = vrot.lane.b32.xlu0 %v328, 126
          %v482 = vpop.permute.xlu0 %481
          %483 = vrot.lane.b32.xlu0 %v332, 126
          %v484 = vpop.permute.xlu0 %483
          %v485 = vsel %vm476, %v482, %v484
          %v486 = vsel %vm476, %v484, %v482
          %v487 = vmul.f32 %v485, %v470
          %v488 = vmul.f32 %v486, %v471
          %v489 = vadd.s32 %v288, 3
          %v490 = vadd.s32 %v289, 3
          %vm491 = vcmp.ge.s32.totalorder %v489, 0
          %vm492 = vcmp.ge.s32.totalorder %v490, 0
          %vm493 = vcmp.lt.s32.totalorder %v489, 16
          %vm494 = vcmp.lt.s32.totalorder %v490, 16
          %vm495 = vmand %vm491, %vm493
          %vm496 = vmand %vm492, %vm494
          %v497 = vsel %vm495, 1, 0
          %v498 = vsel %vm496, 1, 0
          %v499 = vcvt.s32.f32 %v497
          %v500 = vcvt.s32.f32 %v498
          %501 = vrot.lane.b32.xlu0 %v308, 125
          %v502 = vpop.permute.xlu0 %501
          %503 = vrot.lane.b32.xlu0 %v312, 125
          %v504 = vpop.permute.xlu0 %503
          %vm505 = vcmp.lt.s32.totalorder %v286, 125
          %v506 = vsel %vm505, %v502, %v504
          %v507 = vsel %vm505, %v504, %v502
          %v508 = vmul.f32 %v506, %v499
          %v509 = vmul.f32 %v507, %v500
          %510 = vrot.lane.b32.xlu0 %v328, 125
          %v511 = vpop.permute.xlu0 %510
          %512 = vrot.lane.b32.xlu0 %v332, 125
          %v513 = vpop.permute.xlu0 %512
          %v514 = vsel %vm505, %v511, %v513
          %v515 = vsel %vm505, %v513, %v511
          %v516 = vmul.f32 %v514, %v499
          %v517 = vmul.f32 %v515, %v500
          %s518 = sld [smem:[#allocation8]]
          %s519 = sld [smem:[#allocation8 + $0x31]]
          %v520 = vstv %s518
          %v521 = vmul.f32 %v520, %v322
          %v522 = vmul.f32 %v520, %v323
          %v523 = vadd.f32 %v521, 0.0
          %v524 = vadd.f32 %v522, 0.0
          %v525 = vstv %s519
          %v526 = vmul.f32 %v525, %v341
          %v527 = vmul.f32 %v525, %v342
          %v528 = vadd.f32 %v523, %v526
          %v529 = vadd.f32 %v524, %v527
          %s530 = sld [smem:[#allocation8 + $0x1]]
          %s531 = sld [smem:[#allocation8 + $0x32]]
          %v532 = vstv %s530
          %v533 = vmul.f32 %v532, %v362
          %v534 = vmul.f32 %v532, %v363
          %v535 = vadd.f32 %v528, %v533
          %v536 = vadd.f32 %v529, %v534
          %v537 = vstv %s531
          %v538 = vmul.f32 %v537, %v370
          %v539 = vmul.f32 %v537, %v371
          %v540 = vadd.f32 %v535, %v538
          %v541 = vadd.f32 %v536, %v539
          %s542 = sld [smem:[#allocation8 + $0x2]]
          %s543 = sld [smem:[#allocation8 + $0x33]]
          %v544 = vstv %s542
          %v545 = vmul.f32 %v544, %v391
          %v546 = vmul.f32 %v544, %v392
          %v547 = vadd.f32 %v540, %v545
          %v548 = vadd.f32 %v541, %v546
          %v549 = vstv %s543
          %v550 = vmul.f32 %v549, %v399
          %v551 = vmul.f32 %v549, %v400
          %v552 = vadd.f32 %v547, %v550
          %v553 = vadd.f32 %v548, %v551
          %s554 = sld [smem:[#allocation8 + $0x3]]
          %s555 = sld [smem:[#allocation8 + $0x34]]
          %v556 = vstv %s554
          %v557 = vmul.f32 %v556, %v429
          %v559 = vlaneseq
          %v560 = vshrl.u32 %v559, 7
          %v561 = vsub.s32 0, %v560
          %v562 = vrot.slane %v557, %v561
          %v563 = vlaneseq
          %v564 = vshrl.u32 %v563, 7
          %v565 = vsub.s32 1, %v564
          %v566 = vrot.slane %v557, %v565
          %v569 = vadd.f32 %v552, %v562
          %v570 = vadd.f32 %v553, %v566
          %v571 = vstv %s555
          %v572 = vmul.f32 %v571, %v430
          %v574 = vlaneseq
          %v575 = vshrl.u32 %v574, 7
          %v576 = vsub.s32 0, %v575
          %v577 = vrot.slane %v572, %v576
          %v578 = vlaneseq
          %v579 = vshrl.u32 %v578, 7
          %v580 = vsub.s32 1, %v579
          %v581 = vrot.slane %v572, %v580
          %v584 = vadd.f32 %v569, %v577
          %v585 = vadd.f32 %v570, %v581
          %s586 = sld [smem:[#allocation8 + $0x4]]
          %s587 = sld [smem:[#allocation8 + $0x35]]
          %v588 = vstv %s586
          %v589 = vmul.f32 %v588, %v450
          %v590 = vmul.f32 %v588, %v451
          %v591 = vadd.f32 %v584, %v589
          %v592 = vadd.f32 %v585, %v590
          %v593 = vstv %s587
          %v594 = vmul.f32 %v593, %v458
          %v595 = vmul.f32 %v593, %v459
          %v596 = vadd.f32 %v591, %v594
          %v597 = vadd.f32 %v592, %v595
          %s598 = sld [smem:[#allocation8 + $0x5]]
          %s599 = sld [smem:[#allocation8 + $0x36]]
          %v600 = vstv %s598
          %v601 = vmul.f32 %v600, %v479
          %v602 = vmul.f32 %v600, %v480
          %v603 = vadd.f32 %v596, %v601
          %v604 = vadd.f32 %v597, %v602
          %v605 = vstv %s599
          %v606 = vmul.f32 %v605, %v487
          %v607 = vmul.f32 %v605, %v488
          %v608 = vadd.f32 %v603, %v606
          %v609 = vadd.f32 %v604, %v607
          %s610 = sld [smem:[#allocation8 + $0x6]]
          %s611 = sld [smem:[#allocation8 + $0x37]]
          %v612 = vstv %s610
          %v613 = vmul.f32 %v612, %v508
          %v614 = vmul.f32 %v612, %v509
          %v615 = vadd.f32 %v608, %v613
          %v616 = vadd.f32 %v609, %v614
          %v617 = vstv %s611
          %v618 = vmul.f32 %v617, %v516
          %v619 = vmul.f32 %v617, %v517
          %v620 = vadd.f32 %v615, %v618
          %v621 = vadd.f32 %v616, %v619
          %v622 = vadd.s32 %v290, 4294967293
          %v623 = vadd.s32 %v291, 4294967293
          %vm624 = vcmp.ge.s32.totalorder %v622, 0
          %vm625 = vcmp.ge.s32.totalorder %v623, 0
          %vm626 = vcmp.lt.s32.totalorder %v622, 16
          %vm627 = vcmp.lt.s32.totalorder %v623, 16
          %vm628 = vmand %vm624, %vm626
          %vm629 = vmand %vm625, %vm627
          %v630 = vsel %vm628, 1, 0
          %v631 = vsel %vm629, 1, 0
          %v632 = vcvt.s32.f32 %v630
          %v633 = vcvt.s32.f32 %v631
          %634 = vrot.lane.b32.xlu0 %v620, 48
          %v635 = vpop.permute.xlu0 %634
          %636 = vrot.lane.b32.xlu0 %v621, 48
          %v637 = vpop.permute.xlu0 %636
          %vm638 = vcmp.lt.s32.totalorder %v286, 48
          %v639 = vsel %vm638, %v635, %v637
          %v640 = vsel %vm638, %v637, %v635
          %v641 = vmul.f32 %v640, %v632
          %v642 = vmul.f32 %v639, %v633
          %v643 = vadd.f32 %v641, 0.0
          %v644 = vadd.f32 %v642, 0.0
          %s645 = sld [smem:[#allocation8 + $0x7]]
          %s646 = sld [smem:[#allocation8 + $0x38]]
          %v647 = vstv %s645
          %v648 = vmul.f32 %v647, %v322
          %v649 = vmul.f32 %v647, %v323
          %v650 = vadd.f32 %v648, 0.0
          %v651 = vadd.f32 %v649, 0.0
          %v652 = vstv %s646
          %v653 = vmul.f32 %v652, %v341
          %v654 = vmul.f32 %v652, %v342
          %v655 = vadd.f32 %v650, %v653
          %v656 = vadd.f32 %v651, %v654
          %s657 = sld [smem:[#allocation8 + $0x8]]
          %s658 = sld [smem:[#allocation8 + $0x39]]
          %v659 = vstv %s657
          %v660 = vmul.f32 %v659, %v362
          %v661 = vmul.f32 %v659, %v363
          %v662 = vadd.f32 %v655, %v660
          %v663 = vadd.f32 %v656, %v661
          %v664 = vstv %s658
          %v665 = vmul.f32 %v664, %v370
          %v666 = vmul.f32 %v664, %v371
          %v667 = vadd.f32 %v662, %v665
          %v668 = vadd.f32 %v663, %v666
          %s669 = sld [smem:[#allocation8 + $0x9]]
          %s670 = sld [smem:[#allocation8 + $0x3a]]
          %v671 = vstv %s669
          %v672 = vmul.f32 %v671, %v391
          %v673 = vmul.f32 %v671, %v392
          %v674 = vadd.f32 %v667, %v672
          %v675 = vadd.f32 %v668, %v673
          %v676 = vstv %s670
          %v677 = vmul.f32 %v676, %v399
          %v678 = vmul.f32 %v676, %v400
          %v679 = vadd.f32 %v674, %v677
          %v680 = vadd.f32 %v675, %v678
          %s681 = sld [smem:[#allocation8 + $0xa]]
          %s682 = sld [smem:[#allocation8 + $0x3b]]
          %v683 = vstv %s681
          %v684 = vmul.f32 %v683, %v429
          %v686 = vlaneseq
          %v687 = vshrl.u32 %v686, 7
          %v688 = vsub.s32 0, %v687
          %v689 = vrot.slane %v684, %v688
          %v690 = vlaneseq
          %v691 = vshrl.u32 %v690, 7
          %v692 = vsub.s32 1, %v691
          %v693 = vrot.slane %v684, %v692
          %v696 = vadd.f32 %v679, %v689
          %v697 = vadd.f32 %v680, %v693
          %v698 = vstv %s682
          %v699 = vmul.f32 %v698, %v430
          %v701 = vlaneseq
          %v702 = vshrl.u32 %v701, 7
          %v703 = vsub.s32 0, %v702
          %v704 = vrot.slane %v699, %v703
          %v705 = vlaneseq
          %v706 = vshrl.u32 %v705, 7
          %v707 = vsub.s32 1, %v706
          %v708 = vrot.slane %v699, %v707
          %v711 = vadd.f32 %v696, %v704
          %v712 = vadd.f32 %v697, %v708
          %s713 = sld [smem:[#allocation8 + $0xb]]
          %s714 = sld [smem:[#allocation8 + $0x3c]]
          %v715 = vstv %s713
          %v716 = vmul.f32 %v715, %v450
          %v717 = vmul.f32 %v715, %v451
          %v718 = vadd.f32 %v711, %v716
          %v719 = vadd.f32 %v712, %v717
          %v720 = vstv %s714
          %v721 = vmul.f32 %v720, %v458
          %v722 = vmul.f32 %v720, %v459
          %v723 = vadd.f32 %v718, %v721
          %v724 = vadd.f32 %v719, %v722
          %s725 = sld [smem:[#allocation8 + $0xc]]
          %s726 = sld [smem:[#allocation8 + $0x3d]]
          %v727 = vstv %s725
          %v728 = vmul.f32 %v727, %v479
          %v729 = vmul.f32 %v727, %v480
          %v730 = vadd.f32 %v723, %v728
          %v731 = vadd.f32 %v724, %v729
          %v732 = vstv %s726
          %v733 = vmul.f32 %v732, %v487
          %v734 = vmul.f32 %v732, %v488
          %v735 = vadd.f32 %v730, %v733
          %v736 = vadd.f32 %v731, %v734
          %s737 = sld [smem:[#allocation8 + $0xd]]
          %s738 = sld [smem:[#allocation8 + $0x3e]]
          %v739 = vstv %s737
          %v740 = vmul.f32 %v739, %v508
          %v741 = vmul.f32 %v739, %v509
          %v742 = vadd.f32 %v735, %v740
          %v743 = vadd.f32 %v736, %v741
          %v744 = vstv %s738
          %v745 = vmul.f32 %v744, %v516
          %v746 = vmul.f32 %v744, %v517
          %v747 = vadd.f32 %v742, %v745
          %v748 = vadd.f32 %v743, %v746
          %v749 = vadd.s32 %v290, 4294967294
          %v750 = vadd.s32 %v291, 4294967294
          %vm751 = vcmp.ge.s32.totalorder %v749, 0
          %vm752 = vcmp.ge.s32.totalorder %v750, 0
          %vm753 = vcmp.lt.s32.totalorder %v749, 16
          %vm754 = vcmp.lt.s32.totalorder %v750, 16
          %vm755 = vmand %vm751, %vm753
          %vm756 = vmand %vm752, %vm754
          %v757 = vsel %vm755, 1, 0
          %v758 = vsel %vm756, 1, 0
          %v759 = vcvt.s32.f32 %v757
          %v760 = vcvt.s32.f32 %v758
          %761 = vrot.lane.b32.xlu0 %v747, 32
          %v762 = vpop.permute.xlu0 %761
          %763 = vrot.lane.b32.xlu0 %v748, 32
          %v764 = vpop.permute.xlu0 %763
          %vm765 = vcmp.lt.s32.totalorder %v286, 32
          %v766 = vsel %vm765, %v762, %v764
          %v767 = vsel %vm765, %v764, %v762
          %v768 = vmul.f32 %v767, %v759
          %v769 = vmul.f32 %v766, %v760
          %v770 = vadd.f32 %v643, %v768
          %v771 = vadd.f32 %v644, %v769
          %s772 = sld [smem:[#allocation8 + $0xe]]
          %s773 = sld [smem:[#allocation8 + $0x3f]]
          %v774 = vstv %s772
          %v775 = vmul.f32 %v774, %v322
          %v776 = vmul.f32 %v774, %v323
          %v777 = vadd.f32 %v775, 0.0
          %v778 = vadd.f32 %v776, 0.0
          %v779 = vstv %s773
          %v780 = vmul.f32 %v779, %v341
          %v781 = vmul.f32 %v779, %v342
          %v782 = vadd.f32 %v777, %v780
          %v783 = vadd.f32 %v778, %v781
          %s784 = sld [smem:[#allocation8 + $0xf]]
          %s785 = sld [smem:[#allocation8 + $0x40]]
          %v786 = vstv %s784
          %v787 = vmul.f32 %v786, %v362
          %v788 = vmul.f32 %v786, %v363
          %v789 = vadd.f32 %v782, %v787
          %v790 = vadd.f32 %v783, %v788
          %v791 = vstv %s785
          %v792 = vmul.f32 %v791, %v370
          %v793 = vmul.f32 %v791, %v371
          %v794 = vadd.f32 %v789, %v792
          %v795 = vadd.f32 %v790, %v793
          %s796 = sld [smem:[#allocation8 + $0x10]]
          %s797 = sld [smem:[#allocation8 + $0x41]]
          %v798 = vstv %s796
          %v799 = vmul.f32 %v798, %v391
          %v800 = vmul.f32 %v798, %v392
          %v801 = vadd.f32 %v794, %v799
          %v802 = vadd.f32 %v795, %v800
          %v803 = vstv %s797
          %v804 = vmul.f32 %v803, %v399
          %v805 = vmul.f32 %v803, %v400
          %v806 = vadd.f32 %v801, %v804
          %v807 = vadd.f32 %v802, %v805
          %s808 = sld [smem:[#allocation8 + $0x11]]
          %s809 = sld [smem:[#allocation8 + $0x42]]
          %v810 = vstv %s808
          %v811 = vmul.f32 %v810, %v429
          %v813 = vlaneseq
          %v814 = vshrl.u32 %v813, 7
          %v815 = vsub.s32 0, %v814
          %v816 = vrot.slane %v811, %v815
          %v817 = vlaneseq
          %v818 = vshrl.u32 %v817, 7
          %v819 = vsub.s32 1, %v818
          %v820 = vrot.slane %v811, %v819
          %v823 = vadd.f32 %v806, %v816
          %v824 = vadd.f32 %v807, %v820
          %v825 = vstv %s809
          %v826 = vmul.f32 %v825, %v430
          %v828 = vlaneseq
          %v829 = vshrl.u32 %v828, 7
          %v830 = vsub.s32 0, %v829
          %v831 = vrot.slane %v826, %v830
          %v832 = vlaneseq
          %v833 = vshrl.u32 %v832, 7
          %v834 = vsub.s32 1, %v833
          %v835 = vrot.slane %v826, %v834
          %v838 = vadd.f32 %v823, %v831
          %v839 = vadd.f32 %v824, %v835
          %s840 = sld [smem:[#allocation8 + $0x12]]
          %s841 = sld [smem:[#allocation8 + $0x43]]
          %v842 = vstv %s840
          %v843 = vmul.f32 %v842, %v450
          %v844 = vmul.f32 %v842, %v451
          %v845 = vadd.f32 %v838, %v843
          %v846 = vadd.f32 %v839, %v844
          %v847 = vstv %s841
          %v848 = vmul.f32 %v847, %v458
          %v849 = vmul.f32 %v847, %v459
          %v850 = vadd.f32 %v845, %v848
          %v851 = vadd.f32 %v846, %v849
          %s852 = sld [smem:[#allocation8 + $0x13]]
          %s853 = sld [smem:[#allocation8 + $0x44]]
          %v854 = vstv %s852
          %v855 = vmul.f32 %v854, %v479
          %v856 = vmul.f32 %v854, %v480
          %v857 = vadd.f32 %v850, %v855
          %v858 = vadd.f32 %v851, %v856
          %v859 = vstv %s853
          %v860 = vmul.f32 %v859, %v487
          %v861 = vmul.f32 %v859, %v488
          %v862 = vadd.f32 %v857, %v860
          %v863 = vadd.f32 %v858, %v861
          %s864 = sld [smem:[#allocation8 + $0x14]]
          %s865 = sld [smem:[#allocation8 + $0x45]]
          %v866 = vstv %s864
          %v867 = vmul.f32 %v866, %v508
          %v868 = vmul.f32 %v866, %v509
          %v869 = vadd.f32 %v862, %v867
          %v870 = vadd.f32 %v863, %v868
          %v871 = vstv %s865
          %v872 = vmul.f32 %v871, %v516
          %v873 = vmul.f32 %v871, %v517
          %v874 = vadd.f32 %v869, %v872
          %v875 = vadd.f32 %v870, %v873
          %v876 = vadd.s32 %v290, 4294967295
          %v877 = vadd.s32 %v291, 4294967295
          %vm878 = vcmp.ge.s32.totalorder %v876, 0
          %vm879 = vcmp.ge.s32.totalorder %v877, 0
          %vm880 = vcmp.lt.s32.totalorder %v876, 16
          %vm881 = vcmp.lt.s32.totalorder %v877, 16
          %vm882 = vmand %vm878, %vm880
          %vm883 = vmand %vm879, %vm881
          %v884 = vsel %vm882, 1, 0
          %v885 = vsel %vm883, 1, 0
          %v886 = vcvt.s32.f32 %v884
          %v887 = vcvt.s32.f32 %v885
          %888 = vrot.lane.b32.xlu0 %v874, 16
          %v889 = vpop.permute.xlu0 %888
          %890 = vrot.lane.b32.xlu0 %v875, 16
          %v891 = vpop.permute.xlu0 %890
          %vm892 = vcmp.lt.s32.totalorder %v286, 16
          %v893 = vsel %vm892, %v889, %v891
          %v894 = vsel %vm892, %v891, %v889
          %v895 = vmul.f32 %v894, %v886
          %v896 = vmul.f32 %v893, %v887
          %v897 = vadd.f32 %v770, %v895
          %v898 = vadd.f32 %v771, %v896
          %s899 = sld [smem:[#allocation8 + $0x15]]
          %s900 = sld [smem:[#allocation8 + $0x46]]
          %v901 = vstv %s899
          %v902 = vmul.f32 %v901, %v322
          %v903 = vmul.f32 %v901, %v323
          %v904 = vadd.f32 %v902, 0.0
          %v905 = vadd.f32 %v903, 0.0
          %v906 = vstv %s900
          %v907 = vmul.f32 %v906, %v341
          %v908 = vmul.f32 %v906, %v342
          %v909 = vadd.f32 %v904, %v907
          %v910 = vadd.f32 %v905, %v908
          %s911 = sld [smem:[#allocation8 + $0x16]]
          %s912 = sld [smem:[#allocation8 + $0x47]]
          %v913 = vstv %s911
          %v914 = vmul.f32 %v913, %v362
          %v915 = vmul.f32 %v913, %v363
          %v916 = vadd.f32 %v909, %v914
          %v917 = vadd.f32 %v910, %v915
          %v918 = vstv %s912
          %v919 = vmul.f32 %v918, %v370
          %v920 = vmul.f32 %v918, %v371
          %v921 = vadd.f32 %v916, %v919
          %v922 = vadd.f32 %v917, %v920
          %s923 = sld [smem:[#allocation8 + $0x17]]
          %s924 = sld [smem:[#allocation8 + $0x48]]
          %v925 = vstv %s923
          %v926 = vmul.f32 %v925, %v391
          %v927 = vmul.f32 %v925, %v392
          %v928 = vadd.f32 %v921, %v926
          %v929 = vadd.f32 %v922, %v927
          %v930 = vstv %s924
          %v931 = vmul.f32 %v930, %v399
          %v932 = vmul.f32 %v930, %v400
          %v933 = vadd.f32 %v928, %v931
          %v934 = vadd.f32 %v929, %v932
          %s935 = sld [smem:[#allocation8 + $0x18]]
          %s936 = sld [smem:[#allocation8 + $0x49]]
          %v937 = vstv %s935
          %v938 = vmul.f32 %v937, %v429
          %v940 = vlaneseq
          %v941 = vshrl.u32 %v940, 7
          %v942 = vsub.s32 0, %v941
          %v943 = vrot.slane %v938, %v942
          %v944 = vlaneseq
          %v945 = vshrl.u32 %v944, 7
          %v946 = vsub.s32 1, %v945
          %v947 = vrot.slane %v938, %v946
          %v950 = vadd.f32 %v933, %v943
          %v951 = vadd.f32 %v934, %v947
          %v952 = vstv %s936
          %v953 = vmul.f32 %v952, %v430
          %v955 = vlaneseq
          %v956 = vshrl.u32 %v955, 7
          %v957 = vsub.s32 0, %v956
          %v958 = vrot.slane %v953, %v957
          %v959 = vlaneseq
          %v960 = vshrl.u32 %v959, 7
          %v961 = vsub.s32 1, %v960
          %v962 = vrot.slane %v953, %v961
          %v965 = vadd.f32 %v950, %v958
          %v966 = vadd.f32 %v951, %v962
          %s967 = sld [smem:[#allocation8 + $0x19]]
          %s968 = sld [smem:[#allocation8 + $0x4a]]
          %v969 = vstv %s967
          %v970 = vmul.f32 %v969, %v450
          %v971 = vmul.f32 %v969, %v451
          %v972 = vadd.f32 %v965, %v970
          %v973 = vadd.f32 %v966, %v971
          %v974 = vstv %s968
          %v975 = vmul.f32 %v974, %v458
          %v976 = vmul.f32 %v974, %v459
          %v977 = vadd.f32 %v972, %v975
          %v978 = vadd.f32 %v973, %v976
          %s979 = sld [smem:[#allocation8 + $0x1a]]
          %s980 = sld [smem:[#allocation8 + $0x4b]]
          %v981 = vstv %s979
          %v982 = vmul.f32 %v981, %v479
          %v983 = vmul.f32 %v981, %v480
          %v984 = vadd.f32 %v977, %v982
          %v985 = vadd.f32 %v978, %v983
          %v986 = vstv %s980
          %v987 = vmul.f32 %v986, %v487
          %v988 = vmul.f32 %v986, %v488
          %v989 = vadd.f32 %v984, %v987
          %v990 = vadd.f32 %v985, %v988
          %s991 = sld [smem:[#allocation8 + $0x1b]]
          %s992 = sld [smem:[#allocation8 + $0x4c]]
          %v993 = vstv %s991
          %v994 = vmul.f32 %v993, %v508
          %v995 = vmul.f32 %v993, %v509
          %v996 = vadd.f32 %v989, %v994
          %v997 = vadd.f32 %v990, %v995
          %v998 = vstv %s992
          %v999 = vmul.f32 %v998, %v516
          %v1000 = vmul.f32 %v998, %v517
          %v1001 = vadd.f32 %v996, %v999
          %v1002 = vadd.f32 %v997, %v1000
          %vm1003 = vcmp.ge.s32.totalorder %v290, 0
          %vm1004 = vcmp.ge.s32.totalorder %v291, 0
          %vm1005 = vcmp.lt.s32.totalorder %v290, 16
          %vm1006 = vcmp.lt.s32.totalorder %v291, 16
          %vm1007 = vmand %vm1003, %vm1005
          %vm1008 = vmand %vm1004, %vm1006
          %v1009 = vsel %vm1007, 1, 0
          %v1010 = vsel %vm1008, 1, 0
          %v1011 = vcvt.s32.f32 %v1009
          %v1012 = vcvt.s32.f32 %v1010
          %v1013 = vmul.f32 %v1001, %v1011
          %v1014 = vmul.f32 %v1002, %v1012
          %v1015 = vadd.f32 %v897, %v1013
          %v1016 = vadd.f32 %v898, %v1014
          %s1017 = sld [smem:[#allocation8 + $0x1c]]
          %s1018 = sld [smem:[#allocation8 + $0x4d]]
          %v1019 = vstv %s1017
          %v1020 = vmul.f32 %v1019, %v322
          %v1021 = vmul.f32 %v1019, %v323
          %v1022 = vadd.f32 %v1020, 0.0
          %v1023 = vadd.f32 %v1021, 0.0
          %v1024 = vstv %s1018
          %v1025 = vmul.f32 %v1024, %v341
          %v1026 = vmul.f32 %v1024, %v342
          %v1027 = vadd.f32 %v1022, %v1025
          %v1028 = vadd.f32 %v1023, %v1026
          %s1029 = sld [smem:[#allocation8 + $0x1d]]
          %s1030 = sld [smem:[#allocation8 + $0x4e]]
          %v1031 = vstv %s1029
          %v1032 = vmul.f32 %v1031, %v362
          %v1033 = vmul.f32 %v1031, %v363
          %v1034 = vadd.f32 %v1027, %v1032
          %v1035 = vadd.f32 %v1028, %v1033
          %v1036 = vstv %s1030
          %v1037 = vmul.f32 %v1036, %v370
          %v1038 = vmul.f32 %v1036, %v371
          %v1039 = vadd.f32 %v1034, %v1037
          %v1040 = vadd.f32 %v1035, %v1038
          %s1041 = sld [smem:[#allocation8 + $0x1e]]
          %s1042 = sld [smem:[#allocation8 + $0x4f]]
          %v1043 = vstv %s1041
          %v1044 = vmul.f32 %v1043, %v391
          %v1045 = vmul.f32 %v1043, %v392
          %v1046 = vadd.f32 %v1039, %v1044
          %v1047 = vadd.f32 %v1040, %v1045
          %v1048 = vstv %s1042
          %v1049 = vmul.f32 %v1048, %v399
          %v1050 = vmul.f32 %v1048, %v400
          %v1051 = vadd.f32 %v1046, %v1049
          %v1052 = vadd.f32 %v1047, %v1050
          %s1053 = sld [smem:[#allocation8 + $0x1f]]
          %s1054 = sld [smem:[#allocation8 + $0x50]]
          %v1055 = vstv %s1053
          %v1056 = vmul.f32 %v1055, %v429
          %v1058 = vlaneseq
          %v1059 = vshrl.u32 %v1058, 7
          %v1060 = vsub.s32 0, %v1059
          %v1061 = vrot.slane %v1056, %v1060
          %v1062 = vlaneseq
          %v1063 = vshrl.u32 %v1062, 7
          %v1064 = vsub.s32 1, %v1063
          %v1065 = vrot.slane %v1056, %v1064
          %v1068 = vadd.f32 %v1051, %v1061
          %v1069 = vadd.f32 %v1052, %v1065
          %v1070 = vstv %s1054
          %v1071 = vmul.f32 %v1070, %v430
          %v1073 = vlaneseq
          %v1074 = vshrl.u32 %v1073, 7
          %v1075 = vsub.s32 0, %v1074
          %v1076 = vrot.slane %v1071, %v1075
          %v1077 = vlaneseq
          %v1078 = vshrl.u32 %v1077, 7
          %v1079 = vsub.s32 1, %v1078
          %v1080 = vrot.slane %v1071, %v1079
          %v1083 = vadd.f32 %v1068, %v1076
          %v1084 = vadd.f32 %v1069, %v1080
          %s1085 = sld [smem:[#allocation8 + $0x20]]
          %s1086 = sld [smem:[#allocation8 + $0x51]]
          %v1087 = vstv %s1085
          %v1088 = vmul.f32 %v1087, %v450
          %v1089 = vmul.f32 %v1087, %v451
          %v1090 = vadd.f32 %v1083, %v1088
          %v1091 = vadd.f32 %v1084, %v1089
          %v1092 = vstv %s1086
          %v1093 = vmul.f32 %v1092, %v458
          %v1094 = vmul.f32 %v1092, %v459
          %v1095 = vadd.f32 %v1090, %v1093
          %v1096 = vadd.f32 %v1091, %v1094
          %s1097 = sld [smem:[#allocation8 + $0x21]]
          %s1098 = sld [smem:[#allocation8 + $0x52]]
          %v1099 = vstv %s1097
          %v1100 = vmul.f32 %v1099, %v479
          %v1101 = vmul.f32 %v1099, %v480
          %v1102 = vadd.f32 %v1095, %v1100
          %v1103 = vadd.f32 %v1096, %v1101
          %v1104 = vstv %s1098
          %v1105 = vmul.f32 %v1104, %v487
          %v1106 = vmul.f32 %v1104, %v488
          %v1107 = vadd.f32 %v1102, %v1105
          %v1108 = vadd.f32 %v1103, %v1106
          %s1109 = sld [smem:[#allocation8 + $0x22]]
          %s1110 = sld [smem:[#allocation8 + $0x53]]
          %v1111 = vstv %s1109
          %v1112 = vmul.f32 %v1111, %v508
          %v1113 = vmul.f32 %v1111, %v509
          %v1114 = vadd.f32 %v1107, %v1112
          %v1115 = vadd.f32 %v1108, %v1113
          %v1116 = vstv %s1110
          %v1117 = vmul.f32 %v1116, %v516
          %v1118 = vmul.f32 %v1116, %v517
          %v1119 = vadd.f32 %v1114, %v1117
          %v1120 = vadd.f32 %v1115, %v1118
          %v1121 = vadd.s32 %v290, 1
          %v1122 = vadd.s32 %v291, 1
          %vm1123 = vcmp.ge.s32.totalorder %v1121, 0
          %vm1124 = vcmp.ge.s32.totalorder %v1122, 0
          %vm1125 = vcmp.lt.s32.totalorder %v1121, 16
          %vm1126 = vcmp.lt.s32.totalorder %v1122, 16
          %vm1127 = vmand %vm1123, %vm1125
          %vm1128 = vmand %vm1124, %vm1126
          %v1129 = vsel %vm1127, 1, 0
          %v1130 = vsel %vm1128, 1, 0
          %v1131 = vcvt.s32.f32 %v1129
          %v1132 = vcvt.s32.f32 %v1130
          %1133 = vrot.lane.b32.xlu0 %v1119, 112
          %v1134 = vpop.permute.xlu0 %1133
          %1135 = vrot.lane.b32.xlu0 %v1120, 112
          %v1136 = vpop.permute.xlu0 %1135
          %vm1137 = vcmp.lt.s32.totalorder %v286, 112
          %v1138 = vsel %vm1137, %v1134, %v1136
          %v1139 = vsel %vm1137, %v1136, %v1134
          %v1140 = vmul.f32 %v1138, %v1131
          %v1141 = vmul.f32 %v1139, %v1132
          %v1142 = vadd.f32 %v1015, %v1140
          %v1143 = vadd.f32 %v1016, %v1141
          %s1144 = sld [smem:[#allocation8 + $0x23]]
          %s1145 = sld [smem:[#allocation8 + $0x54]]
          %v1146 = vstv %s1144
          %v1147 = vmul.f32 %v1146, %v322
          %v1148 = vmul.f32 %v1146, %v323
          %v1149 = vadd.f32 %v1147, 0.0
          %v1150 = vadd.f32 %v1148, 0.0
          %v1151 = vstv %s1145
          %v1152 = vmul.f32 %v1151, %v341
          %v1153 = vmul.f32 %v1151, %v342
          %v1154 = vadd.f32 %v1149, %v1152
          %v1155 = vadd.f32 %v1150, %v1153
          %s1156 = sld [smem:[#allocation8 + $0x24]]
          %s1157 = sld [smem:[#allocation8 + $0x55]]
          %v1158 = vstv %s1156
          %v1159 = vmul.f32 %v1158, %v362
          %v1160 = vmul.f32 %v1158, %v363
          %v1161 = vadd.f32 %v1154, %v1159
          %v1162 = vadd.f32 %v1155, %v1160
          %v1163 = vstv %s1157
          %v1164 = vmul.f32 %v1163, %v370
          %v1165 = vmul.f32 %v1163, %v371
          %v1166 = vadd.f32 %v1161, %v1164
          %v1167 = vadd.f32 %v1162, %v1165
          %s1168 = sld [smem:[#allocation8 + $0x25]]
          %s1169 = sld [smem:[#allocation8 + $0x56]]
          %v1170 = vstv %s1168
          %v1171 = vmul.f32 %v1170, %v391
          %v1172 = vmul.f32 %v1170, %v392
          %v1173 = vadd.f32 %v1166, %v1171
          %v1174 = vadd.f32 %v1167, %v1172
          %v1175 = vstv %s1169
          %v1176 = vmul.f32 %v1175, %v399
          %v1177 = vmul.f32 %v1175, %v400
          %v1178 = vadd.f32 %v1173, %v1176
          %v1179 = vadd.f32 %v1174, %v1177
          %s1180 = sld [smem:[#allocation8 + $0x26]]
          %s1181 = sld [smem:[#allocation8 + $0x57]]
          %v1182 = vstv %s1180
          %v1183 = vmul.f32 %v1182, %v429
          %v1185 = vlaneseq
          %v1186 = vshrl.u32 %v1185, 7
          %v1187 = vsub.s32 0, %v1186
          %v1188 = vrot.slane %v1183, %v1187
          %v1189 = vlaneseq
          %v1190 = vshrl.u32 %v1189, 7
          %v1191 = vsub.s32 1, %v1190
          %v1192 = vrot.slane %v1183, %v1191
          %v1195 = vadd.f32 %v1178, %v1188
          %v1196 = vadd.f32 %v1179, %v1192
          %v1197 = vstv %s1181
          %v1198 = vmul.f32 %v1197, %v430
          %v1200 = vlaneseq
          %v1201 = vshrl.u32 %v1200, 7
          %v1202 = vsub.s32 0, %v1201
          %v1203 = vrot.slane %v1198, %v1202
          %v1204 = vlaneseq
          %v1205 = vshrl.u32 %v1204, 7
          %v1206 = vsub.s32 1, %v1205
          %v1207 = vrot.slane %v1198, %v1206
          %v1210 = vadd.f32 %v1195, %v1203
          %v1211 = vadd.f32 %v1196, %v1207
          %s1212 = sld [smem:[#allocation8 + $0x27]]
          %s1213 = sld [smem:[#allocation8 + $0x58]]
          %v1214 = vstv %s1212
          %v1215 = vmul.f32 %v1214, %v450
          %v1216 = vmul.f32 %v1214, %v451
          %v1217 = vadd.f32 %v1210, %v1215
          %v1218 = vadd.f32 %v1211, %v1216
          %v1219 = vstv %s1213
          %v1220 = vmul.f32 %v1219, %v458
          %v1221 = vmul.f32 %v1219, %v459
          %v1222 = vadd.f32 %v1217, %v1220
          %v1223 = vadd.f32 %v1218, %v1221
          %s1224 = sld [smem:[#allocation8 + $0x28]]
          %s1225 = sld [smem:[#allocation8 + $0x59]]
          %v1226 = vstv %s1224
          %v1227 = vmul.f32 %v1226, %v479
          %v1228 = vmul.f32 %v1226, %v480
          %v1229 = vadd.f32 %v1222, %v1227
          %v1230 = vadd.f32 %v1223, %v1228
          %v1231 = vstv %s1225
          %v1232 = vmul.f32 %v1231, %v487
          %v1233 = vmul.f32 %v1231, %v488
          %v1234 = vadd.f32 %v1229, %v1232
          %v1235 = vadd.f32 %v1230, %v1233
          %s1236 = sld [smem:[#allocation8 + $0x29]]
          %s1237 = sld [smem:[#allocation8 + $0x5a]]
          %v1238 = vstv %s1236
          %v1239 = vmul.f32 %v1238, %v508
          %v1240 = vmul.f32 %v1238, %v509
          %v1241 = vadd.f32 %v1234, %v1239
          %v1242 = vadd.f32 %v1235, %v1240
          %v1243 = vstv %s1237
          %v1244 = vmul.f32 %v1243, %v516
          %v1245 = vmul.f32 %v1243, %v517
          %v1246 = vadd.f32 %v1241, %v1244
          %v1247 = vadd.f32 %v1242, %v1245
          %v1248 = vadd.s32 %v290, 2
          %v1249 = vadd.s32 %v291, 2
          %vm1250 = vcmp.ge.s32.totalorder %v1248, 0
          %vm1251 = vcmp.ge.s32.totalorder %v1249, 0
          %vm1252 = vcmp.lt.s32.totalorder %v1248, 16
          %vm1253 = vcmp.lt.s32.totalorder %v1249, 16
          %vm1254 = vmand %vm1250, %vm1252
          %vm1255 = vmand %vm1251, %vm1253
          %v1256 = vsel %vm1254, 1, 0
          %v1257 = vsel %vm1255, 1, 0
          %v1258 = vcvt.s32.f32 %v1256
          %v1259 = vcvt.s32.f32 %v1257
          %1260 = vrot.lane.b32.xlu0 %v1246, 96
          %v1261 = vpop.permute.xlu0 %1260
          %1262 = vrot.lane.b32.xlu0 %v1247, 96
          %v1263 = vpop.permute.xlu0 %1262
          %vm1264 = vcmp.lt.s32.totalorder %v286, 96
          %v1265 = vsel %vm1264, %v1261, %v1263
          %v1266 = vsel %vm1264, %v1263, %v1261
          %v1267 = vmul.f32 %v1265, %v1258
          %v1268 = vmul.f32 %v1266, %v1259
          %v1269 = vadd.f32 %v1142, %v1267
          %v1270 = vadd.f32 %v1143, %v1268
          %s1271 = sld [smem:[#allocation8 + $0x2a]]
          %s1272 = sld [smem:[#allocation8 + $0x5b]]
          %v1273 = vstv %s1271
          %v1274 = vmul.f32 %v1273, %v322
          %v1275 = vmul.f32 %v1273, %v323
          %v1276 = vadd.f32 %v1274, 0.0
          %v1277 = vadd.f32 %v1275, 0.0
          %v1278 = vstv %s1272
          %v1279 = vmul.f32 %v1278, %v341
          %v1280 = vmul.f32 %v1278, %v342
          %v1281 = vadd.f32 %v1276, %v1279
          %v1282 = vadd.f32 %v1277, %v1280
          %s1283 = sld [smem:[#allocation8 + $0x2b]]
          %s1284 = sld [smem:[#allocation8 + $0x5c]]
          %v1285 = vstv %s1283
          %v1286 = vmul.f32 %v1285, %v362
          %v1287 = vmul.f32 %v1285, %v363
          %v1288 = vadd.f32 %v1281, %v1286
          %v1289 = vadd.f32 %v1282, %v1287
          %v1290 = vstv %s1284
          %v1291 = vmul.f32 %v1290, %v370
          %v1292 = vmul.f32 %v1290, %v371
          %v1293 = vadd.f32 %v1288, %v1291
          %v1294 = vadd.f32 %v1289, %v1292
          %s1295 = sld [smem:[#allocation8 + $0x2c]]
          %s1296 = sld [smem:[#allocation8 + $0x5d]]
          %v1297 = vstv %s1295
          %v1298 = vmul.f32 %v1297, %v391
          %v1299 = vmul.f32 %v1297, %v392
          %v1300 = vadd.f32 %v1293, %v1298
          %v1301 = vadd.f32 %v1294, %v1299
          %v1302 = vstv %s1296
          %v1303 = vmul.f32 %v1302, %v399
          %v1304 = vmul.f32 %v1302, %v400
          %v1305 = vadd.f32 %v1300, %v1303
          %v1306 = vadd.f32 %v1301, %v1304
          %s1307 = sld [smem:[#allocation8 + $0x2d]]
          %s1308 = sld [smem:[#allocation8 + $0x5e]]
          %v1309 = vstv %s1307
          %v1310 = vmul.f32 %v1309, %v429
          %v1312 = vlaneseq
          %v1313 = vshrl.u32 %v1312, 7
          %v1314 = vsub.s32 0, %v1313
          %v1315 = vrot.slane %v1310, %v1314
          %v1316 = vlaneseq
          %v1317 = vshrl.u32 %v1316, 7
          %v1318 = vsub.s32 1, %v1317
          %v1319 = vrot.slane %v1310, %v1318
          %v1322 = vadd.f32 %v1305, %v1315
          %v1323 = vadd.f32 %v1306, %v1319
          %v1324 = vstv %s1308
          %v1325 = vmul.f32 %v1324, %v430
          %v1327 = vlaneseq
          %v1328 = vshrl.u32 %v1327, 7
          %v1329 = vsub.s32 0, %v1328
          %v1330 = vrot.slane %v1325, %v1329
          %v1331 = vlaneseq
          %v1332 = vshrl.u32 %v1331, 7
          %v1333 = vsub.s32 1, %v1332
          %v1334 = vrot.slane %v1325, %v1333
          %v1337 = vadd.f32 %v1322, %v1330
          %v1338 = vadd.f32 %v1323, %v1334
          %s1339 = sld [smem:[#allocation8 + $0x2e]]
          %s1340 = sld [smem:[#allocation8 + $0x5f]]
          %v1341 = vstv %s1339
          %v1342 = vmul.f32 %v1341, %v450
          %v1343 = vmul.f32 %v1341, %v451
          %v1344 = vadd.f32 %v1337, %v1342
          %v1345 = vadd.f32 %v1338, %v1343
          %v1346 = vstv %s1340
          %v1347 = vmul.f32 %v1346, %v458
          %v1348 = vmul.f32 %v1346, %v459
          %v1349 = vadd.f32 %v1344, %v1347
          %v1350 = vadd.f32 %v1345, %v1348
          %s1351 = sld [smem:[#allocation8 + $0x2f]]
          %s1352 = sld [smem:[#allocation8 + $0x60]]
          %v1353 = vstv %s1351
          %v1354 = vmul.f32 %v1353, %v479
          %v1355 = vmul.f32 %v1353, %v480
          %v1356 = vadd.f32 %v1349, %v1354
          %v1357 = vadd.f32 %v1350, %v1355
          %v1358 = vstv %s1352
          %v1359 = vmul.f32 %v1358, %v487
          %v1360 = vmul.f32 %v1358, %v488
          %v1361 = vadd.f32 %v1356, %v1359
          %v1362 = vadd.f32 %v1357, %v1360
          %s1363 = sld [smem:[#allocation8 + $0x30]]
          %s1364 = sld [smem:[#allocation8 + $0x61]]
          %v1365 = vstv %s1363
          %v1366 = vmul.f32 %v1365, %v508
          %v1367 = vmul.f32 %v1365, %v509
          %v1368 = vadd.f32 %v1361, %v1366
          %v1369 = vadd.f32 %v1362, %v1367
          %v1370 = vstv %s1364
          %v1371 = vmul.f32 %v1370, %v516
          %v1372 = vmul.f32 %v1370, %v517
          %v1373 = vadd.f32 %v1368, %v1371
          %v1374 = vadd.f32 %v1369, %v1372
          %v1375 = vadd.s32 %v290, 3
          %v1376 = vadd.s32 %v291, 3
          %vm1377 = vcmp.ge.s32.totalorder %v1375, 0
          %vm1378 = vcmp.ge.s32.totalorder %v1376, 0
          %vm1379 = vcmp.lt.s32.totalorder %v1375, 16
          %vm1380 = vcmp.lt.s32.totalorder %v1376, 16
          %vm1381 = vmand %vm1377, %vm1379
          %vm1382 = vmand %vm1378, %vm1380
          %v1383 = vsel %vm1381, 1, 0
          %v1384 = vsel %vm1382, 1, 0
          %v1385 = vcvt.s32.f32 %v1383
          %v1386 = vcvt.s32.f32 %v1384
          %1387 = vrot.lane.b32.xlu0 %v1373, 80
          %v1388 = vpop.permute.xlu0 %1387
          %1389 = vrot.lane.b32.xlu0 %v1374, 80
          %v1390 = vpop.permute.xlu0 %1389
          %vm1391 = vcmp.lt.s32.totalorder %v286, 80
          %v1392 = vsel %vm1391, %v1388, %v1390
          %v1393 = vsel %vm1391, %v1390, %v1388
          %v1394 = vmul.f32 %v1392, %v1385
          %v1395 = vmul.f32 %v1393, %v1386
          %v1396 = vadd.f32 %v1269, %v1394
          %v1397 = vadd.f32 %v1270, %v1395
          %v1398 = vxor.u32 %v1396, 2147483648
          %v1399 = vxor.u32 %v1397, 2147483648
          %v1400 = vmul.f32 %v1398, 1.442695
          %v1401 = vpow.pop %v1400
          %v1402 = vmul.f32 %v1399, 1.442695
          %v1403 = vpow.pop %v1402
          %v1404 = vadd.f32 %v1401, 1.0
          %v1405 = vadd.f32 %v1403, 1.0
          %v1406 = vrcp.pop %v1404
          %v1407 = vmul.f32 1.0, %v1406
          %v1408 = vrcp.pop %v1405
          %v1409 = vmul.f32 1.0, %v1408
          %v1412 = vcombine.low %v1407, %v1409
          %v1414 = vunpack.c.l.s4 1966171168
          %v1415 = vunpack.c.0.s8 %v1414
          %v1416 = vlaneseq
          %v1417 = vshrl.u32 %v1416, 7
          %v1418 = vsub.s32 %v1415, %v1417
          %v1419 = vrot.slane %v1412, %v1418
          %v1421 = vunpack.c.l.s4 1966171168
          %v1422 = vunpack.c.0.s8 %v1421
          %v1423 = vlaneseq
          %v1424 = vshrl.u32 %v1423, 7
          %v1425 = vsub.s32 %v1422, %v1424
          %v1426 = vrot.slane %v1419, %v1425
          %1428 = vst.msk [vmem:[%s189] sm:$0x3] %vm256, %v1426
        $region44: #{tpu_custom_call.1} parent=27 // pred_fallthru
          _
        %s1429 = sand.u32 %s89, 1
        %s1430 = scalar_lea.sflag [#allocation6], %s1429
        %s1431 = sand.u32 %s89, 1
        %s1432 = smul.addr %s1431, 2
        %s1433 = scalar_lea.vmem [#allocation9], %s1432
        // Predicated region
        $region45: #{tpu_custom_call.1} parent=27 // pred_check
          %p1434 = pneg %p99
        $region46: #{tpu_custom_call.1} parent=27 // pred_check_branch
          %1436 = sbr.rel (%p1434) target = $region48
        $region47: #{tpu_custom_call.1} parent=27 // pred_region
          %s1438 = ssub.s32 32, 32
          %1439 = vsyncadd %s1430, %s1438
          %s1440 = smul.addr %s24, 2
          %s1441 = smul.addr %s1440, 16
          %s1442 = scalar_lea.hbm %s2, %s1441
          %s1444 = sshll.u32 %s1433, 4
          %s1445 = int_to_ptr.vmem [resolvable:$true] %s1444
          %1447 = dma.vmem_to_hbm [thread:$0]  %s1445, 32, %s1442, %s1430
        $region48: #{tpu_custom_call.1} parent=27 // pred_fallthru
          _
      $region28: #{tpu_custom_call.1} parent=5 // pred_fallthru
        _
      %p1448 = scmp.le.s32.totalorder 2, %s15
      // Predicated region
      $region49: #{tpu_custom_call.1} parent=5 // pred_check
        %p1449 = pneg %p1448
      $region50: #{tpu_custom_call.1} parent=5 // pred_check_branch
        %1451 = sbr.rel (%p1449) target = $region52
      $region51: #{tpu_custom_call.1} parent=5 // pred_region
        %s1452 = ssub.s32 %s15, 2
        // Predicated region
        $region53: #{tpu_custom_call.1} parent=51 // pred_check
          %p1453 = pneg %p105
        $region54: #{tpu_custom_call.1} parent=51 // pred_check_branch
          %1455 = sbr.rel (%p1453) target = $region56
        $region55: #{tpu_custom_call.1} parent=51 // pred_region
          %s1456 = sand.u32 %s90, 1
          %s1457 = scalar_lea.sflag [#allocation6], %s1456
          %s1458 = sand.u32 %s90, 1
          %s1459 = smul.addr %s1458, 2
          %s1460 = scalar_lea.vmem [#allocation9], %s1459
          %1461 = dma.done %s1457, 32
        $region56: #{tpu_custom_call.1} parent=51 // pred_fallthru
          _
      $region52: #{tpu_custom_call.1} parent=5 // pred_fallthru
        _
    $region6: #{tpu_custom_call.1} parent=1 // loop_footer
      %s19 = sadd.s32 1, %s15
    $region7: #{tpu_custom_call.1} parent=1 // loop_footer_branch
      %14 = sbr.rel target = $region3
    $region8: #{tpu_custom_call.1} parent=1 // loop_exit
      _
    %1462 = vsyncpa [#allocation5], 1
    %s1463 = scalar_lea.sflag [#allocation5], 1
    %1464 = vsyncpa %s1463, 1
    %1465 = vsyncpa [#allocation6], 1
    %s1466 = scalar_lea.sflag [#allocation6], 1
    %1467 = vsyncpa %s1466, 1
    %1468 = vsyncpa [#allocation7], 1
    %s1469 = scalar_lea.sflag [#allocation7], 1
    %1470 = vsyncpa %s1469, 1

</llo_original>
